<compile_context>
chip_gen: v6e
topology: v6e:2x2x1
jax: 0.10.0
libtpu: 0.0.40
codegen_flags: <defaults>
</compile_context>

<pallas_src>
import jax
import jax.numpy as jnp
from jax.experimental import pallas as pl
from jax.experimental.pallas import tpu as pltpu

NEG_INF = -1e30  # bias fill for padded class columns -> exp underflows to 0


def _round_up(n, m):
    return ((n + m - 1) // m) * m


# ----------------------------------------------------------------------------
# Kernel
# ----------------------------------------------------------------------------
def guesser_kernel(alphas_ref, x_ref,
                   w1_ref, b1_ref, w2_ref, b2_ref, w3_ref, b3_ref,
                   wl_ref, bl_ref, out_ref):
    nc_pad = wl_ref.shape[1]

    def dense(h, w_ref, b_ref):
        # MXU matmul; operands in the stored weight dtype (f32 or bf16),
        # accumulation always f32. Bias add stays f32 (VPU).
        acc = jnp.dot(h.astype(w_ref.dtype), w_ref[...],
                      preferred_element_type=jnp.float32)
        return acc + b_ref[...]

    def prelu(h, a):
        # single scalar alpha per layer (nn.PReLU() default), f32 VPU math
        return jnp.where(h >= 0.0, h, a * h)

    h = x_ref[...]
    h = prelu(dense(h, w1_ref, b1_ref), alphas_ref[0])
    h = prelu(dense(h, w2_ref, b2_ref), alphas_ref[1])
    h = prelu(dense(h, w3_ref, b3_ref), alphas_ref[2])

    logits = dense(h, wl_ref, bl_ref)          # padded class cols ~= -1e30

    # numerically stable softmax over the (padded) class dim; padded columns
    # contribute exp(-1e30 - m) == 0 so they do not perturb the result.
    m = jnp.max(logits, axis=1, keepdims=True)
    e = jnp.exp(logits - m)
    probs = e * pl.reciprocal(jnp.sum(e, axis=1, keepdims=True), approx=True)

    # Two 128-lane-aligned dense stores into one output slab (no masked vst).
    out_ref[:, :nc_pad] = logits
    out_ref[:, nc_pad:] = probs


# ----------------------------------------------------------------------------
# Wrapper
# ----------------------------------------------------------------------------
def adaptive_fs_guesser_forward(x, packed, *, tb=512):
    """x: (B, state_dim) f32.  packed: dict from pack_params().  Returns (logits, probs)."""
    B, state_dim = x.shape
    ncp = packed["wl"].shape[1]
    nc = packed["num_classes"]

    # batch tile: multiple of 8 sublanes, as large as practical
    tb = max(8, min(int(tb), _round_up(B, 8)))
    tb = (tb // 8) * 8
    Bp = _round_up(B, tb)
    if Bp != B:
        x = jnp.pad(x, ((0, Bp - B), (0, 0)))
    grid = (Bp // tb,)

    fixed = lambda i: (0, 0)          # weights/biases resident across grid steps

    # VMEM budget: resident weights + double-buffered x/out tiles. Only raise
    # the limit when needed; cap at 64 MiB (v7x physical VMEM).
    weight_bytes = sum(int(packed[k].size) * packed[k].dtype.itemsize
                       for k in ("w1", "b1", "w2", "b2", "w3", "b3", "wl", "bl"))
    io_bytes = 2 * (tb * state_dim * 4 + tb * 2 * ncp * 4)
    vmem_est = weight_bytes + io_bytes
    vmem_limit = None
    if vmem_est > 24 * 1024 * 1024:
        vmem_limit = min(int(vmem_est * 1.5), 64 * 1024 * 1024)

    out = pl.pallas_call(
        guesser_kernel,
        out_shape=jax.ShapeDtypeStruct((Bp, 2 * ncp), jnp.float32),
        grid_spec=pltpu.PrefetchScalarGridSpec(
            num_scalar_prefetch=0,
            grid=grid,
            in_specs=[
                pl.BlockSpec(memory_space=pltpu.MemorySpace.SMEM),     # alphas (3,)
                pl.BlockSpec((tb, state_dim), lambda i: (i, 0)),       # x tile
                pl.BlockSpec(packed["w1"].shape, fixed),
                pl.BlockSpec(packed["b1"].shape, fixed),
                pl.BlockSpec(packed["w2"].shape, fixed),
                pl.BlockSpec(packed["b2"].shape, fixed),
                pl.BlockSpec(packed["w3"].shape, fixed),
                pl.BlockSpec(packed["b3"].shape, fixed),
                pl.BlockSpec(packed["wl"].shape, fixed),
                pl.BlockSpec(packed["bl"].shape, fixed),
            ],
            out_specs=pl.BlockSpec((tb, 2 * ncp), lambda i: (i, 0)),
        ),
        compiler_params=pltpu.CompilerParams(
            dimension_semantics=("parallel",),   # shard batch grid over v7x's 2 TCs
            vmem_limit_bytes=vmem_limit,
        ),
    )(packed["alphas"], x,
      packed["w1"], packed["b1"], packed["w2"], packed["b2"],
      packed["w3"], packed["b3"], packed["wl"], packed["bl"])

    logits = out[:B, :nc]
    probs = out[:B, ncp:ncp + nc]
    return logits, probs


# ----------------------------------------------------------------------------
# Params (raw = math layout; packed = TPU-friendly padded layout)
# ----------------------------------------------------------------------------
def make_params(key, state_dim, hidden_dim, num_classes):
    """Raw params: W stored pre-transposed as (in, out), b as (out,), one PReLU alpha per layer."""
    ks = jax.random.split(key, 8)
    scale = 0.1

    def lin(kw, kb, fi, fo):
        return (scale * jax.random.normal(kw, (fi, fo), jnp.float32),
                scale * jax.random.normal(kb, (fo,), jnp.float32))

    w1, b1 = lin(ks[0], ks[1], state_dim, hidden_dim)
    w2, b2 = lin(ks[2], ks[3], hidden_dim, hidden_dim)
    w3, b3 = lin(ks[4], ks[5], hidden_dim, hidden_dim)
    wl, bl = lin(ks[6], ks[7], hidden_dim, num_classes)
    # nn.PReLU() inits all alphas to 0.25; use distinct values here to exercise
    # the per-layer indexing (semantics: one learnable scalar per layer).
    alphas = jnp.array([0.25, 0.1, 0.4], jnp.float32)
    return {"w1": w1, "b1": b1, "w2": w2, "b2": b2, "w3": w3, "b3": b3,
            "wl": wl, "bl": bl, "alphas": alphas}


def pack_params(raw, weight_dtype=jnp.float32):
    """Pad hidden to a multiple of 128 lanes and classes to 128 lanes (zero weights,
    -1e30 bias in padded class columns). Optionally store weights in bf16 for the MXU."""
    state_dim, hidden = raw["w1"].shape
    num_classes = raw["wl"].shape[1]
    hp = _round_up(hidden, 128)
    ncp = _round_up(num_classes, 128)

    def pad_w(w, rows, cols):
        return jnp.pad(w, ((0, rows - w.shape[0]), (0, cols - w.shape[1]))).astype(weight_dtype)

    def pad_b(b, cols, fill=0.0):
        return jnp.pad(b, (0, cols - b.shape[0]),
                       constant_values=fill).reshape(1, cols).astype(jnp.float32)

    return {
        "w1": pad_w(raw["w1"], state_dim, hp), "b1": pad_b(raw["b1"], hp),
        "w2": pad_w(raw["w2"], hp, hp),        "b2": pad_b(raw["b2"], hp),
        "w3": pad_w(raw["w3"], hp, hp),        "b3": pad_b(raw["b3"], hp),
        "wl": pad_w(raw["wl"], hp, ncp),       "bl": pad_b(raw["bl"], ncp, fill=NEG_INF),
        "alphas": raw["alphas"].astype(jnp.float32),
        "num_classes": num_classes,
    }


# ----------------------------------------------------------------------------
# Pure-JAX reference (exact module semantics, f32, high-precision matmul)
# ----------------------------------------------------------------------------
def reference_forward(x, raw):
    hp = jax.lax.Precision.HIGHEST

    def prelu(h, a):
        return jnp.where(h >= 0.0, h, a * h)

    h = prelu(jnp.dot(x, raw["w1"], precision=hp) + raw["b1"], raw["alphas"][0])
    h = prelu(jnp.dot(h, raw["w2"], precision=hp) + raw["b2"], raw["alphas"][1])
    h = prelu(jnp.dot(h, raw["w3"], precision=hp) + raw["b3"], raw["alphas"][2])
    logits = jnp.dot(h, raw["wl"], precision=hp) + raw["bl"]
    return logits, jax.nn.softmax(logits, axis=1)


if __name__ == "__main__":
    key = jax.random.PRNGKey(0)
    k_x, k_p = jax.random.split(key)

    # small but grid-exercising shapes (hidden=64 gets padded to 128 lanes)
    batch, state_dim, hidden_dim, num_classes = 500, 32, 64, 2
    x = jax.random.normal(k_x, (batch, state_dim), jnp.float32)
    raw = make_params(k_p, state_dim, hidden_dim, num_classes)
    ref_logits, ref_probs = reference_forward(x, raw)

    # --- f32 weight path (exact module semantics) -------------------------
    packed_f32 = pack_params(raw, weight_dtype=jnp.float32)
    logits, probs = adaptive_fs_guesser_forward(x, packed_f32, tb=128)
    jax.block_until_ready((logits, probs))

    assert logits.shape == (batch, num_classes) and probs.shape == (batch, num_classes)
    assert jnp.allclose(logits, ref_logits, atol=1e-4, rtol=1e-4)
    # softmax denominator uses the approximate EUP reciprocal -> looser direct check,
    # but renormalizing cancels the reciprocal error so the structure is checked tightly.
    assert jnp.allclose(probs, ref_probs, atol=2e-2, rtol=2e-2)
    assert jnp.allclose(jnp.sum(probs, axis=1), 1.0, atol=2e-2)
    renorm = probs / jnp.sum(probs, axis=1, keepdims=True)
    assert jnp.allclose(renorm, ref_probs, atol=1e-4, rtol=1e-4)

    # --- bf16 weight/operand path (native v6e/v7x MXU dtype, f32 accumulate) ----
    packed_bf16 = pack_params(raw, weight_dtype=jnp.bfloat16)
    lg16, pb16 = adaptive_fs_guesser_forward(x, packed_bf16, tb=128)
    jax.block_until_ready((lg16, pb16))
    assert jnp.allclose(lg16, ref_logits, atol=5e-2, rtol=5e-2)
    assert jnp.allclose(pb16, ref_probs, atol=5e-2, rtol=5e-2)

    print("KERNEL_OK")
</pallas_src>

<mosaic_0001>
module attributes {stable_mosaic.version = 11 : i64} {
  func.func @guesser_kernel(%arg0: i32, %arg1: memref<3xf32, #tpu.memory_space<smem>>, %arg2: memref<128x32xf32, #tpu.memory_space<vmem>>, %arg3: memref<32x128xf32, #tpu.memory_space<vmem>>, %arg4: memref<1x128xf32, #tpu.memory_space<vmem>>, %arg5: memref<128x128xf32, #tpu.memory_space<vmem>>, %arg6: memref<1x128xf32, #tpu.memory_space<vmem>>, %arg7: memref<128x128xf32, #tpu.memory_space<vmem>>, %arg8: memref<1x128xf32, #tpu.memory_space<vmem>>, %arg9: memref<128x128xf32, #tpu.memory_space<vmem>>, %arg10: memref<1x128xf32, #tpu.memory_space<vmem>>, %arg11: memref<128x256xf32, #tpu.memory_space<vmem>>) attributes {dimension_semantics = [#tpu.dimension_semantics<parallel>], iteration_bounds = array<i64: 4>, scalar_prefetch = 0 : i64, scratch_operands = 0 : i64, tpu.core_type = #tpu.core_type<tc>, window_params = [{transform_indices = @transform_0, window_bounds = array<i64: 3>}, {transform_indices = @transform_1, window_bounds = array<i64: 128, 32>}, {pipeline_mode = #tpu.pipeline_mode<synchronous>, transform_indices = @transform_2, window_bounds = array<i64: 32, 128>}, {pipeline_mode = #tpu.pipeline_mode<synchronous>, transform_indices = @transform_3, window_bounds = array<i64: 1, 128>}, {pipeline_mode = #tpu.pipeline_mode<synchronous>, transform_indices = @transform_4, window_bounds = array<i64: 128, 128>}, {pipeline_mode = #tpu.pipeline_mode<synchronous>, transform_indices = @transform_5, window_bounds = array<i64: 1, 128>}, {pipeline_mode = #tpu.pipeline_mode<synchronous>, transform_indices = @transform_6, window_bounds = array<i64: 128, 128>}, {pipeline_mode = #tpu.pipeline_mode<synchronous>, transform_indices = @transform_7, window_bounds = array<i64: 1, 128>}, {pipeline_mode = #tpu.pipeline_mode<synchronous>, transform_indices = @transform_8, window_bounds = array<i64: 128, 128>}, {pipeline_mode = #tpu.pipeline_mode<synchronous>, transform_indices = @transform_9, window_bounds = array<i64: 1, 128>}, {transform_indices = @transform_10, window_bounds = array<i64: 128, 256>}]} {
    %c0 = arith.constant 0 : index
    %c0_0 = arith.constant 0 : index
    %0 = vector.load %arg2[%c0, %c0_0] : memref<128x32xf32, #tpu.memory_space<vmem>>, vector<128x32xf32>
    %c0_1 = arith.constant 0 : index
    %c0_2 = arith.constant 0 : index
    %1 = vector.load %arg3[%c0_1, %c0_2] : memref<32x128xf32, #tpu.memory_space<vmem>>, vector<32x128xf32>
    %cst = arith.constant dense<0.000000e+00> : vector<128x128xf32>
    %2 = tpu.matmul %0, %1, %cst {dimension_numbers = #tpu.dot_dimension_numbers<[1], [0], [0], [1], [0, 0, 1, 1], [], []>} : vector<128x32xf32>, vector<32x128xf32>, vector<128x128xf32> -> vector<128x128xf32>
    %c0_3 = arith.constant 0 : index
    %c0_4 = arith.constant 0 : index
    %3 = vector.load %arg4[%c0_3, %c0_4] : memref<1x128xf32, #tpu.memory_space<vmem>>, vector<1x128xf32>
    %4 = vector.broadcast %3 : vector<1x128xf32> to vector<128x128xf32>
    %5 = arith.addf %2, %4 : vector<128x128xf32>
    %c0_5 = arith.constant 0 : index
    %6 = memref.load %arg1[%c0_5] : memref<3xf32, #tpu.memory_space<smem>>
    %cst_6 = arith.constant 0.000000e+00 : f32
    %7 = vector.broadcast %cst_6 : f32 to vector<128x128xf32>
    %8 = arith.cmpf oge, %5, %7 : vector<128x128xf32>
    %9 = vector.broadcast %6 : f32 to vector<128x128xf32>
    %10 = arith.mulf %9, %5 : vector<128x128xf32>
    %11 = arith.select %8, %5, %10 : vector<128x128xi1>, vector<128x128xf32>
    %c0_7 = arith.constant 0 : index
    %c0_8 = arith.constant 0 : index
    %12 = vector.load %arg5[%c0_7, %c0_8] : memref<128x128xf32, #tpu.memory_space<vmem>>, vector<128x128xf32>
    %cst_9 = arith.constant dense<0.000000e+00> : vector<128x128xf32>
    %13 = tpu.matmul %11, %12, %cst_9 {dimension_numbers = #tpu.dot_dimension_numbers<[1], [0], [0], [1], [0, 0, 1, 1], [], []>} : vector<128x128xf32>, vector<128x128xf32>, vector<128x128xf32> -> vector<128x128xf32>
    %c0_10 = arith.constant 0 : index
    %c0_11 = arith.constant 0 : index
    %14 = vector.load %arg6[%c0_10, %c0_11] : memref<1x128xf32, #tpu.memory_space<vmem>>, vector<1x128xf32>
    %15 = vector.broadcast %14 : vector<1x128xf32> to vector<128x128xf32>
    %16 = arith.addf %13, %15 : vector<128x128xf32>
    %c1 = arith.constant 1 : index
    %17 = memref.load %arg1[%c1] : memref<3xf32, #tpu.memory_space<smem>>
    %cst_12 = arith.constant 0.000000e+00 : f32
    %18 = vector.broadcast %cst_12 : f32 to vector<128x128xf32>
    %19 = arith.cmpf oge, %16, %18 : vector<128x128xf32>
    %20 = vector.broadcast %17 : f32 to vector<128x128xf32>
    %21 = arith.mulf %20, %16 : vector<128x128xf32>
    %22 = arith.select %19, %16, %21 : vector<128x128xi1>, vector<128x128xf32>
    %c0_13 = arith.constant 0 : index
    %c0_14 = arith.constant 0 : index
    %23 = vector.load %arg7[%c0_13, %c0_14] : memref<128x128xf32, #tpu.memory_space<vmem>>, vector<128x128xf32>
    %cst_15 = arith.constant dense<0.000000e+00> : vector<128x128xf32>
    %24 = tpu.matmul %22, %23, %cst_15 {dimension_numbers = #tpu.dot_dimension_numbers<[1], [0], [0], [1], [0, 0, 1, 1], [], []>} : vector<128x128xf32>, vector<128x128xf32>, vector<128x128xf32> -> vector<128x128xf32>
    %c0_16 = arith.constant 0 : index
    %c0_17 = arith.constant 0 : index
    %25 = vector.load %arg8[%c0_16, %c0_17] : memref<1x128xf32, #tpu.memory_space<vmem>>, vector<1x128xf32>
    %26 = vector.broadcast %25 : vector<1x128xf32> to vector<128x128xf32>
    %27 = arith.addf %24, %26 : vector<128x128xf32>
    %c2 = arith.constant 2 : index
    %28 = memref.load %arg1[%c2] : memref<3xf32, #tpu.memory_space<smem>>
    %cst_18 = arith.constant 0.000000e+00 : f32
    %29 = vector.broadcast %cst_18 : f32 to vector<128x128xf32>
    %30 = arith.cmpf oge, %27, %29 : vector<128x128xf32>
    %31 = vector.broadcast %28 : f32 to vector<128x128xf32>
    %32 = arith.mulf %31, %27 : vector<128x128xf32>
    %33 = arith.select %30, %27, %32 : vector<128x128xi1>, vector<128x128xf32>
    %c0_19 = arith.constant 0 : index
    %c0_20 = arith.constant 0 : index
    %34 = vector.load %arg9[%c0_19, %c0_20] : memref<128x128xf32, #tpu.memory_space<vmem>>, vector<128x128xf32>
    %cst_21 = arith.constant dense<0.000000e+00> : vector<128x128xf32>
    %35 = tpu.matmul %33, %34, %cst_21 {dimension_numbers = #tpu.dot_dimension_numbers<[1], [0], [0], [1], [0, 0, 1, 1], [], []>} : vector<128x128xf32>, vector<128x128xf32>, vector<128x128xf32> -> vector<128x128xf32>
    %c0_22 = arith.constant 0 : index
    %c0_23 = arith.constant 0 : index
    %36 = vector.load %arg10[%c0_22, %c0_23] : memref<1x128xf32, #tpu.memory_space<vmem>>, vector<1x128xf32>
    %37 = vector.broadcast %36 : vector<1x128xf32> to vector<128x128xf32>
    %38 = arith.addf %35, %37 : vector<128x128xf32>
    %cst_24 = arith.constant dense<0xFF800000> : vector<128xf32>
    %39 = vector.multi_reduction <maximumf>, %38, %cst_24 [1] : vector<128x128xf32> to vector<128xf32>
    %40 = vector.shape_cast %39 : vector<128xf32> to vector<128x1xf32>
    %41 = vector.broadcast %40 : vector<128x1xf32> to vector<128x128xf32>
    %42 = arith.subf %38, %41 : vector<128x128xf32>
    %43 = math.exp %42 : vector<128x128xf32>
    %cst_25 = arith.constant dense<0.000000e+00> : vector<128xf32>
    %44 = vector.multi_reduction <add>, %43, %cst_25 [1] : vector<128x128xf32> to vector<128xf32>
    %45 = vector.shape_cast %44 : vector<128xf32> to vector<128x1xf32>
    %46 = tpu.reciprocal %45 {approx = true} : vector<128x1xf32> -> vector<128x1xf32>
    %47 = vector.broadcast %46 : vector<128x1xf32> to vector<128x128xf32>
    %48 = arith.mulf %43, %47 : vector<128x128xf32>
    %c0_26 = arith.constant 0 : index
    %c0_27 = arith.constant 0 : index
    %49 = vector.load %arg11[%c0_26, %c0_27] : memref<128x256xf32, #tpu.memory_space<vmem>>, vector<128x128xf32>
    tpu.vector_store %arg11[%c0_26, %c0_27], %38 {strides = array<i32>} : memref<128x256xf32, #tpu.memory_space<vmem>>, vector<128x128xf32>,
    %c0_28 = arith.constant 0 : index
    %c128 = arith.constant 128 : index
    %50 = vector.load %arg11[%c0_28, %c128] : memref<128x256xf32, #tpu.memory_space<vmem>>, vector<128x128xf32>
    tpu.vector_store %arg11[%c0_28, %c128], %48 {strides = array<i32>} : memref<128x256xf32, #tpu.memory_space<vmem>>, vector<128x128xf32>,
    return
  }
  func.func @transform_0(%arg0: i32) -> i32 {
    %c0_i32 = arith.constant 0 : i32
    %c0_i32_0 = arith.constant 0 : i32
    return %c0_i32 : i32
  }
  func.func @transform_1(%arg0: i32) -> (i32, i32) {
    %c0_i32 = arith.constant 0 : i32
    %c0_i32_0 = arith.constant 0 : i32
    return %arg0, %c0_i32 : i32, i32
  }
  func.func @transform_2(%arg0: i32) -> (i32, i32) {
    %c0_i32 = arith.constant 0 : i32
    %c0_i32_0 = arith.constant 0 : i32
    %c0_i32_1 = arith.constant 0 : i32
    return %c0_i32, %c0_i32_0 : i32, i32
  }
  func.func @transform_3(%arg0: i32) -> (i32, i32) {
    %c0_i32 = arith.constant 0 : i32
    %c0_i32_0 = arith.constant 0 : i32
    %c0_i32_1 = arith.constant 0 : i32
    return %c0_i32, %c0_i32_0 : i32, i32
  }
  func.func @transform_4(%arg0: i32) -> (i32, i32) {
    %c0_i32 = arith.constant 0 : i32
    %c0_i32_0 = arith.constant 0 : i32
    %c0_i32_1 = arith.constant 0 : i32
    return %c0_i32, %c0_i32_0 : i32, i32
  }
  func.func @transform_5(%arg0: i32) -> (i32, i32) {
    %c0_i32 = arith.constant 0 : i32
    %c0_i32_0 = arith.constant 0 : i32
    %c0_i32_1 = arith.constant 0 : i32
    return %c0_i32, %c0_i32_0 : i32, i32
  }
  func.func @transform_6(%arg0: i32) -> (i32, i32) {
    %c0_i32 = arith.constant 0 : i32
    %c0_i32_0 = arith.constant 0 : i32
    %c0_i32_1 = arith.constant 0 : i32
    return %c0_i32, %c0_i32_0 : i32, i32
  }
  func.func @transform_7(%arg0: i32) -> (i32, i32) {
    %c0_i32 = arith.constant 0 : i32
    %c0_i32_0 = arith.constant 0 : i32
    %c0_i32_1 = arith.constant 0 : i32
    return %c0_i32, %c0_i32_0 : i32, i32
  }
  func.func @transform_8(%arg0: i32) -> (i32, i32) {
    %c0_i32 = arith.constant 0 : i32
    %c0_i32_0 = arith.constant 0 : i32
    %c0_i32_1 = arith.constant 0 : i32
    return %c0_i32, %c0_i32_0 : i32, i32
  }
  func.func @transform_9(%arg0: i32) -> (i32, i32) {
    %c0_i32 = arith.constant 0 : i32
    %c0_i32_0 = arith.constant 0 : i32
    %c0_i32_1 = arith.constant 0 : i32
    return %c0_i32, %c0_i32_0 : i32, i32
  }
  func.func @transform_10(%arg0: i32) -> (i32, i32) {
    %c0_i32 = arith.constant 0 : i32
    %c0_i32_0 = arith.constant 0 : i32
    return %arg0, %c0_i32 : i32, i32
  }
}

</mosaic_0001>

<llo_original>
// kernel: tpu_custom_call.1
$region0: #{tpu_custom_call.1}
  #allocation0 [shape = 'u32[]', space=smem, size = 0x4, offset = 0x4, fixed_abs, tag = 'smem constant byte address 0x4 - core index']
  #allocation1 [shape = 'u32[144,128]{1,0:T(1,128)}', space=vmem, size = 0x12000, scoped, tag = 'internal scratch']
  %s0 = inlined_call_operand.vmem [shape: f32[3], index: 0, kind: input, shape index: {}]
  %s1 = inlined_call_operand.vmem [shape: f32[512,32], index: 1, kind: input, shape index: {}]
  %s2 = inlined_call_operand.vmem [shape: f32[32,128], index: 2, kind: input, shape index: {}]
  %s3 = inlined_call_operand.vmem [shape: f32[1,128], index: 3, kind: input, shape index: {}]
  %s4 = inlined_call_operand.vmem [shape: f32[128,128], index: 4, kind: input, shape index: {}]
  %s5 = inlined_call_operand.vmem [shape: f32[1,128], index: 5, kind: input, shape index: {}]
  %s6 = inlined_call_operand.vmem [shape: f32[128,128], index: 6, kind: input, shape index: {}]
  %s7 = inlined_call_operand.vmem [shape: f32[1,128], index: 7, kind: input, shape index: {}]
  %s8 = inlined_call_operand.vmem [shape: f32[128,128], index: 8, kind: input, shape index: {}]
  %s9 = inlined_call_operand.vmem [shape: f32[1,128], index: 9, kind: input, shape index: {}]
  %s10 = inlined_call_operand.hbm [shape: f32[512,256], index: 10, kind: output, shape index: {}]
  %s11 = sld [smem:[#allocation0]]
  $region77: #{tpu_custom_call.1} parent=0
    _
  %s13 = ssub.s32 1, %s11
  %s14 = scalar_select 0, %s13, %s11
  $region1: #{tpu_custom_call.1} parent=0
    #allocation2 [shape = 'u8[512]{0}', space=smem, size = 0x200, scoped, tag = 'input window, operand 0, single buffered']
    #allocation3 [shape = 's32[2]{0}', space=sflag, size = 0x8, scoped, tag = 'scoped memory for tpu_custom_call.1']
    #allocation4 [shape = 's32[2]{0}', space=sflag, size = 0x8, scoped, tag = 'scoped memory for tpu_custom_call.1']
    #allocation5 [shape = 'u8[262144]{0}', space=vmem, size = 0x40000, scoped, tag = 'output window, operand 0']
    %15 = vsyncpa [#allocation4], 0
    %16 = vsyncpa [#allocation3], 0
    %s17 = scalar_lea.sflag [#allocation3], 1
    %18 = vsyncpa %s17, 0
    loop: start=0, step=1, limit=6
    $region2: #{tpu_custom_call.1} parent=1 // loop_pre_header
      _
    $region3: #{tpu_custom_call.1} parent=1 // loop_header
      %s20 = sphi 0, %s24
      %p21 = scmp.ge.s32.totalorder %s20, 6
      %s28 = sphi 0, %s28
      %s30 = sphi 0, %s28
      %s31 = sphi 0, %s30
      %s45 = sphi 0, %s31
      %s51 = sphi 0, %s53
      %s54 = sphi 0, %s51
      %s55 = sphi 0, %s54
      %s71 = sphi 0, %s55
      %s75 = sphi 0, %s75
      %s77 = sphi 0, %s75
      %s78 = sphi 0, %s77
      %s92 = sphi 0, %s78
      %s96 = sphi 0, %s96
      %s98 = sphi 0, %s96
      %s99 = sphi 0, %s98
      %s113 = sphi 0, %s99
      %s117 = sphi 0, %s117
      %s119 = sphi 0, %s117
      %s120 = sphi 0, %s119
      %s134 = sphi 0, %s120
      %s138 = sphi 0, %s138
      %s140 = sphi 0, %s138
      %s141 = sphi 0, %s140
      %s155 = sphi 0, %s141
      %s159 = sphi 0, %s159
      %s161 = sphi 0, %s159
      %s162 = sphi 0, %s161
      %s176 = sphi 0, %s162
      %s180 = sphi 0, %s180
      %s182 = sphi 0, %s180
      %s183 = sphi 0, %s182
      %s197 = sphi 0, %s183
      %s201 = sphi 0, %s201
      %s203 = sphi 0, %s201
      %s204 = sphi 0, %s203
      %s218 = sphi 0, %s204
      %s222 = sphi 0, %s222
      %s224 = sphi 0, %s222
      %s225 = sphi 0, %s224
      %s239 = sphi 0, %s225
      %s245 = sphi 0, %s247
      %s248 = sphi 0, %s245
      %s249 = sphi 0, %s248
      %s265 = sphi 0, %s249
    $region4: #{tpu_custom_call.1} parent=1 // loop_header_branch
      %23 = sbr.rel (%p21) target = $region8
    $region5: #{tpu_custom_call.1} parent=1 // loop_body
      %s25 = ssub.s32 %s20, 1
      %s26 = ssub.s32 %s20, 2
      %s27 = sadd.s32 %s20, 1
      %s29 = sadd.s32 %s28, 1
      %p32 = scmp.eq.s32.totalorder %s20, 3
      %p33 = scmp.ne.s32.totalorder %s28, %s30
      %p34 = scmp.eq.s32.totalorder %s20, 0
      %p35 = por %p33, %p34
      %p36 = scmp.ne.s32.totalorder %s28, %s30
      %p37 = scmp.eq.s32.totalorder %s25, 3
      %p38 = por %p36, %p37
      %p39 = scmp.ne.s32.totalorder %s30, %s31
      %p40 = scmp.eq.s32.totalorder %s25, 0
      %p41 = por %p39, %p40
      %p42 = scmp.ne.s32.totalorder %s30, %s31
      %p43 = scmp.eq.s32.totalorder %s26, 3
      %p44 = por %p42, %p43
      %p46 = scmp.ne.s32.totalorder %s31, %s45
      %p47 = scmp.eq.s32.totalorder %s26, 0
      %p48 = por %p46, %p47
      %s49 = ssub.s32 %s20, %s27
      %p50 = scmp.eq.s32.totalorder %s49, 0
      %s52 = sadd.s32 %s51, 1
      %s53 = scalar_select %p50, %s51, %s52
      %p56 = pneg %p50
      %p57 = scmp.eq.s32.totalorder %s20, 3
      %p58 = por %p56, %p57
      %p59 = scmp.ne.s32.totalorder %s51, %s54
      %p60 = scmp.eq.s32.totalorder %s20, 0
      %p61 = por %p59, %p60
      %p62 = scmp.ne.s32.totalorder %s51, %s54
      %p63 = scmp.eq.s32.totalorder %s25, 3
      %p64 = por %p62, %p63
      %p65 = scmp.ne.s32.totalorder %s54, %s55
      %p66 = scmp.eq.s32.totalorder %s25, 0
      %p67 = por %p65, %p66
      %p68 = scmp.ne.s32.totalorder %s54, %s55
      %p69 = scmp.eq.s32.totalorder %s26, 3
      %p70 = por %p68, %p69
      %p72 = scmp.ne.s32.totalorder %s55, %s71
      %p73 = scmp.eq.s32.totalorder %s26, 0
      %p74 = por %p72, %p73
      %s76 = sadd.s32 %s75, 1
      %p79 = scmp.eq.s32.totalorder %s20, 3
      %p80 = scmp.ne.s32.totalorder %s75, %s77
      %p81 = scmp.eq.s32.totalorder %s20, 0
      %p82 = por %p80, %p81
      %p83 = scmp.ne.s32.totalorder %s75, %s77
      %p84 = scmp.eq.s32.totalorder %s25, 3
      %p85 = por %p83, %p84
      %p86 = scmp.ne.s32.totalorder %s77, %s78
      %p87 = scmp.eq.s32.totalorder %s25, 0
      %p88 = por %p86, %p87
      %p89 = scmp.ne.s32.totalorder %s77, %s78
      %p90 = scmp.eq.s32.totalorder %s26, 3
      %p91 = por %p89, %p90
      %p93 = scmp.ne.s32.totalorder %s78, %s92
      %p94 = scmp.eq.s32.totalorder %s26, 0
      %p95 = por %p93, %p94
      %s97 = sadd.s32 %s96, 1
      %p100 = scmp.eq.s32.totalorder %s20, 3
      %p101 = scmp.ne.s32.totalorder %s96, %s98
      %p102 = scmp.eq.s32.totalorder %s20, 0
      %p103 = por %p101, %p102
      %p104 = scmp.ne.s32.totalorder %s96, %s98
      %p105 = scmp.eq.s32.totalorder %s25, 3
      %p106 = por %p104, %p105
      %p107 = scmp.ne.s32.totalorder %s98, %s99
      %p108 = scmp.eq.s32.totalorder %s25, 0
      %p109 = por %p107, %p108
      %p110 = scmp.ne.s32.totalorder %s98, %s99
      %p111 = scmp.eq.s32.totalorder %s26, 3
      %p112 = por %p110, %p111
      %p114 = scmp.ne.s32.totalorder %s99, %s113
      %p115 = scmp.eq.s32.totalorder %s26, 0
      %p116 = por %p114, %p115
      %s118 = sadd.s32 %s117, 1
      %p121 = scmp.eq.s32.totalorder %s20, 3
      %p122 = scmp.ne.s32.totalorder %s117, %s119
      %p123 = scmp.eq.s32.totalorder %s20, 0
      %p124 = por %p122, %p123
      %p125 = scmp.ne.s32.totalorder %s117, %s119
      %p126 = scmp.eq.s32.totalorder %s25, 3
      %p127 = por %p125, %p126
      %p128 = scmp.ne.s32.totalorder %s119, %s120
      %p129 = scmp.eq.s32.totalorder %s25, 0
      %p130 = por %p128, %p129
      %p131 = scmp.ne.s32.totalorder %s119, %s120
      %p132 = scmp.eq.s32.totalorder %s26, 3
      %p133 = por %p131, %p132
      %p135 = scmp.ne.s32.totalorder %s120, %s134
      %p136 = scmp.eq.s32.totalorder %s26, 0
      %p137 = por %p135, %p136
      %s139 = sadd.s32 %s138, 1
      %p142 = scmp.eq.s32.totalorder %s20, 3
      %p143 = scmp.ne.s32.totalorder %s138, %s140
      %p144 = scmp.eq.s32.totalorder %s20, 0
      %p145 = por %p143, %p144
      %p146 = scmp.ne.s32.totalorder %s138, %s140
      %p147 = scmp.eq.s32.totalorder %s25, 3
      %p148 = por %p146, %p147
      %p149 = scmp.ne.s32.totalorder %s140, %s141
      %p150 = scmp.eq.s32.totalorder %s25, 0
      %p151 = por %p149, %p150
      %p152 = scmp.ne.s32.totalorder %s140, %s141
      %p153 = scmp.eq.s32.totalorder %s26, 3
      %p154 = por %p152, %p153
      %p156 = scmp.ne.s32.totalorder %s141, %s155
      %p157 = scmp.eq.s32.totalorder %s26, 0
      %p158 = por %p156, %p157
      %s160 = sadd.s32 %s159, 1
      %p163 = scmp.eq.s32.totalorder %s20, 3
      %p164 = scmp.ne.s32.totalorder %s159, %s161
      %p165 = scmp.eq.s32.totalorder %s20, 0
      %p166 = por %p164, %p165
      %p167 = scmp.ne.s32.totalorder %s159, %s161
      %p168 = scmp.eq.s32.totalorder %s25, 3
      %p169 = por %p167, %p168
      %p170 = scmp.ne.s32.totalorder %s161, %s162
      %p171 = scmp.eq.s32.totalorder %s25, 0
      %p172 = por %p170, %p171
      %p173 = scmp.ne.s32.totalorder %s161, %s162
      %p174 = scmp.eq.s32.totalorder %s26, 3
      %p175 = por %p173, %p174
      %p177 = scmp.ne.s32.totalorder %s162, %s176
      %p178 = scmp.eq.s32.totalorder %s26, 0
      %p179 = por %p177, %p178
      %s181 = sadd.s32 %s180, 1
      %p184 = scmp.eq.s32.totalorder %s20, 3
      %p185 = scmp.ne.s32.totalorder %s180, %s182
      %p186 = scmp.eq.s32.totalorder %s20, 0
      %p187 = por %p185, %p186
      %p188 = scmp.ne.s32.totalorder %s180, %s182
      %p189 = scmp.eq.s32.totalorder %s25, 3
      %p190 = por %p188, %p189
      %p191 = scmp.ne.s32.totalorder %s182, %s183
      %p192 = scmp.eq.s32.totalorder %s25, 0
      %p193 = por %p191, %p192
      %p194 = scmp.ne.s32.totalorder %s182, %s183
      %p195 = scmp.eq.s32.totalorder %s26, 3
      %p196 = por %p194, %p195
      %p198 = scmp.ne.s32.totalorder %s183, %s197
      %p199 = scmp.eq.s32.totalorder %s26, 0
      %p200 = por %p198, %p199
      %s202 = sadd.s32 %s201, 1
      %p205 = scmp.eq.s32.totalorder %s20, 3
      %p206 = scmp.ne.s32.totalorder %s201, %s203
      %p207 = scmp.eq.s32.totalorder %s20, 0
      %p208 = por %p206, %p207
      %p209 = scmp.ne.s32.totalorder %s201, %s203
      %p210 = scmp.eq.s32.totalorder %s25, 3
      %p211 = por %p209, %p210
      %p212 = scmp.ne.s32.totalorder %s203, %s204
      %p213 = scmp.eq.s32.totalorder %s25, 0
      %p214 = por %p212, %p213
      %p215 = scmp.ne.s32.totalorder %s203, %s204
      %p216 = scmp.eq.s32.totalorder %s26, 3
      %p217 = por %p215, %p216
      %p219 = scmp.ne.s32.totalorder %s204, %s218
      %p220 = scmp.eq.s32.totalorder %s26, 0
      %p221 = por %p219, %p220
      %s223 = sadd.s32 %s222, 1
      %p226 = scmp.eq.s32.totalorder %s20, 3
      %p227 = scmp.ne.s32.totalorder %s222, %s224
      %p228 = scmp.eq.s32.totalorder %s20, 0
      %p229 = por %p227, %p228
      %p230 = scmp.ne.s32.totalorder %s222, %s224
      %p231 = scmp.eq.s32.totalorder %s25, 3
      %p232 = por %p230, %p231
      %p233 = scmp.ne.s32.totalorder %s224, %s225
      %p234 = scmp.eq.s32.totalorder %s25, 0
      %p235 = por %p233, %p234
      %p236 = scmp.ne.s32.totalorder %s224, %s225
      %p237 = scmp.eq.s32.totalorder %s26, 3
      %p238 = por %p236, %p237
      %p240 = scmp.ne.s32.totalorder %s225, %s239
      %p241 = scmp.eq.s32.totalorder %s26, 0
      %p242 = por %p240, %p241
      %s243 = ssub.s32 %s20, %s27
      %p244 = scmp.eq.s32.totalorder %s243, 0
      %s246 = sadd.s32 %s245, 1
      %s247 = scalar_select %p244, %s245, %s246
      %p250 = pneg %p244
      %p251 = scmp.eq.s32.totalorder %s20, 3
      %p252 = por %p250, %p251
      %p253 = scmp.ne.s32.totalorder %s245, %s248
      %p254 = scmp.eq.s32.totalorder %s20, 0
      %p255 = por %p253, %p254
      %p256 = scmp.ne.s32.totalorder %s245, %s248
      %p257 = scmp.eq.s32.totalorder %s25, 3
      %p258 = por %p256, %p257
      %p259 = scmp.ne.s32.totalorder %s248, %s249
      %p260 = scmp.eq.s32.totalorder %s25, 0
      %p261 = por %p259, %p260
      %p262 = scmp.ne.s32.totalorder %s248, %s249
      %p263 = scmp.eq.s32.totalorder %s26, 3
      %p264 = por %p262, %p263
      %p266 = scmp.ne.s32.totalorder %s249, %s265
      %p267 = scmp.eq.s32.totalorder %s26, 0
      %p268 = por %p266, %p267
      %p269 = scmp.le.s32.totalorder 1, %s20
      %p270 = scmp.lt.s32.totalorder %s20, 5
      %p271 = pnand %p269, %p270
      %p272 = pneg %p271
      // Predicated region
      $region9: #{tpu_custom_call.1} parent=5 // pred_check
        _
      $region10: #{tpu_custom_call.1} parent=5 // pred_check_branch
        %274 = sbr.rel (%p271) target = $region12
      $region11: #{tpu_custom_call.1} parent=5 // pred_region
        %s275 = ssub.s32 %s20, 1
        // Predicated region
        $region13: #{tpu_custom_call.1} parent=11 // pred_check
          %p276 = pneg %p41
        $region14: #{tpu_custom_call.1} parent=11 // pred_check_branch
          %278 = sbr.rel (%p276) target = $region16
        $region15: #{tpu_custom_call.1} parent=11 // pred_region
          %s280 = ssub.s32 16, 16
          %281 = vsyncadd [#allocation4], %s280
          %s283 = sshll.u32 %s0, 4
          %s284 = int_to_ptr.vmem [resolvable:$true] %s283
          %286 = dma.vmem_to_smem %s284, 16, [#allocation2], [#allocation4]
        $region16: #{tpu_custom_call.1} parent=11 // pred_fallthru
          _
        // Predicated region
        $region17: #{tpu_custom_call.1} parent=11 // pred_check
          %p287 = pneg %p88
        $region18: #{tpu_custom_call.1} parent=11 // pred_check_branch
          %289 = sbr.rel (%p287) target = $region20
        $region19: #{tpu_custom_call.1} parent=11 // pred_region
          _
        $region20: #{tpu_custom_call.1} parent=11 // pred_fallthru
          _
        // Predicated region
        $region21: #{tpu_custom_call.1} parent=11 // pred_check
          %p290 = pneg %p109
        $region22: #{tpu_custom_call.1} parent=11 // pred_check_branch
          %292 = sbr.rel (%p290) target = $region24
        $region23: #{tpu_custom_call.1} parent=11 // pred_region
          _
        $region24: #{tpu_custom_call.1} parent=11 // pred_fallthru
          _
        // Predicated region
        $region25: #{tpu_custom_call.1} parent=11 // pred_check
          %p293 = pneg %p130
        $region26: #{tpu_custom_call.1} parent=11 // pred_check_branch
          %295 = sbr.rel (%p293) target = $region28
        $region27: #{tpu_custom_call.1} parent=11 // pred_region
          _
        $region28: #{tpu_custom_call.1} parent=11 // pred_fallthru
          _
        // Predicated region
        $region29: #{tpu_custom_call.1} parent=11 // pred_check
          %p296 = pneg %p151
        $region30: #{tpu_custom_call.1} parent=11 // pred_check_branch
          %298 = sbr.rel (%p296) target = $region32
        $region31: #{tpu_custom_call.1} parent=11 // pred_region
          _
        $region32: #{tpu_custom_call.1} parent=11 // pred_fallthru
          _
        // Predicated region
        $region33: #{tpu_custom_call.1} parent=11 // pred_check
          %p299 = pneg %p172
        $region34: #{tpu_custom_call.1} parent=11 // pred_check_branch
          %301 = sbr.rel (%p299) target = $region36
        $region35: #{tpu_custom_call.1} parent=11 // pred_region
          _
        $region36: #{tpu_custom_call.1} parent=11 // pred_fallthru
          _
        // Predicated region
        $region37: #{tpu_custom_call.1} parent=11 // pred_check
          %p302 = pneg %p193
        $region38: #{tpu_custom_call.1} parent=11 // pred_check_branch
          %304 = sbr.rel (%p302) target = $region40
        $region39: #{tpu_custom_call.1} parent=11 // pred_region
          _
        $region40: #{tpu_custom_call.1} parent=11 // pred_fallthru
          _
        // Predicated region
        $region41: #{tpu_custom_call.1} parent=11 // pred_check
          %p305 = pneg %p214
        $region42: #{tpu_custom_call.1} parent=11 // pred_check_branch
          %307 = sbr.rel (%p305) target = $region44
        $region43: #{tpu_custom_call.1} parent=11 // pred_region
          _
        $region44: #{tpu_custom_call.1} parent=11 // pred_fallthru
          _
        // Predicated region
        $region45: #{tpu_custom_call.1} parent=11 // pred_check
          %p308 = pneg %p235
        $region46: #{tpu_custom_call.1} parent=11 // pred_check_branch
          %310 = sbr.rel (%p308) target = $region48
        $region47: #{tpu_custom_call.1} parent=11 // pred_region
          _
        $region48: #{tpu_custom_call.1} parent=11 // pred_fallthru
          _
      $region12: #{tpu_custom_call.1} parent=5 // pred_fallthru
        _
      %p311 = scmp.lt.s32.totalorder %s20, 4
      // Predicated region
      $region49: #{tpu_custom_call.1} parent=5 // pred_check
        %p312 = pneg %p311
      $region50: #{tpu_custom_call.1} parent=5 // pred_check_branch
        %314 = sbr.rel (%p312) target = $region52
      $region51: #{tpu_custom_call.1} parent=5 // pred_region
        // Predicated region
        $region53: #{tpu_custom_call.1} parent=51 // pred_check
          %p315 = pneg %p61
        $region54: #{tpu_custom_call.1} parent=51 // pred_check_branch
          %317 = sbr.rel (%p315) target = $region56
        $region55: #{tpu_custom_call.1} parent=51 // pred_region
          %s318 = smul.u32 16, %s20
          %p319 = scmp.lt.s32.totalorder %s318, 63
          %s320 = scalar_select %p319, %s318, 63
          %s321 = smul.addr %s320, 8
          %s322 = scalar_lea.vmem %s1, %s321
          %s323 = smul.u32 16, %s20
        $region56: #{tpu_custom_call.1} parent=51 // pred_fallthru
          _
      $region52: #{tpu_custom_call.1} parent=5 // pred_fallthru
        _
      %p324 = scmp.le.s32.totalorder 1, %s20
      %p325 = scmp.lt.s32.totalorder %s20, 5
      %p326 = pnand %p324, %p325
      %p327 = pneg %p326
      // Predicated region
      $region57: #{tpu_custom_call.1} parent=5 // pred_check
        _
      $region58: #{tpu_custom_call.1} parent=5 // pred_check_branch
        %329 = sbr.rel (%p326) target = $region60
      $region59: #{tpu_custom_call.1} parent=5 // pred_region
        %s330 = ssub.s32 %s20, 1
        // Predicated region
        $region61: #{tpu_custom_call.1} parent=59 // pred_check
          %p331 = pneg %p41
        $region62: #{tpu_custom_call.1} parent=59 // pred_check_branch
          %333 = sbr.rel (%p331) target = $region64
        $region63: #{tpu_custom_call.1} parent=59 // pred_region
          %334 = dma.done [#allocation4], 16
        $region64: #{tpu_custom_call.1} parent=59 // pred_fallthru
          _
        %335 = sfence
        %p336 = pneg %p41
        %p337 = pneg %p38
        %s338 = smul.u32 16, %s25
        %p339 = scmp.lt.s32.totalorder %s338, 63
        %s340 = scalar_select %p339, %s338, 63
        %s341 = smul.addr %s340, 8
        %s342 = scalar_lea.vmem %s1, %s341
        %p343 = pneg %p67
        %p344 = pneg %p64
        %p345 = pneg %p88
        %p346 = pneg %p85
        %p347 = pneg %p109
        %p348 = pneg %p106
        %p349 = pneg %p130
        %p350 = pneg %p127
        %p351 = pneg %p151
        %p352 = pneg %p148
        %p353 = pneg %p172
        %p354 = pneg %p169
        %p355 = pneg %p193
        %p356 = pneg %p190
        %p357 = pneg %p214
        %p358 = pneg %p211
        %p359 = pneg %p235
        %p360 = pneg %p232
        %p361 = pneg %p261
        %p362 = pneg %p258
        %s363 = sand.u32 %s248, 1
        %s364 = scalar_lea.sflag [#allocation3], %s363
        %s365 = sand.u32 %s248, 1
        %s366 = smul.addr %s365, 256
        %s367 = scalar_lea.vmem [#allocation5], %s366
        %s368 = smul.u32 16, %s25
        %p369 = scmp.lt.s32.totalorder %s368, 63
        %s370 = scalar_select %p369, %s368, 63
        %s371 = smul.addr %s370, 8
        %s372 = scalar_lea.vmem %s1, %s371
        %s373 = smul.u32 16, %s25
        %s374 = smul.u32 16, %s25
        %v375 = vld [vmem:[%s372] sm:$0xff]
        %v376 = vld [vmem:[%s372 + $0x8] sm:$0xff]
        %v377 = vld [vmem:[%s372 + $0x10] sm:$0xff]
        %v378 = vld [vmem:[%s372 + $0x18] sm:$0xff]
        %v379 = vld [vmem:[%s372 + $0x20] sm:$0xff]
        %v380 = vld [vmem:[%s372 + $0x28] sm:$0xff]
        %v381 = vld [vmem:[%s372 + $0x30] sm:$0xff]
        %v382 = vld [vmem:[%s372 + $0x38] sm:$0xff]
        %v383 = vld [vmem:[%s372 + $0x40] sm:$0xff]
        %v384 = vld [vmem:[%s372 + $0x48] sm:$0xff]
        %v385 = vld [vmem:[%s372 + $0x50] sm:$0xff]
        %v386 = vld [vmem:[%s372 + $0x58] sm:$0xff]
        %v387 = vld [vmem:[%s372 + $0x60] sm:$0xff]
        %v388 = vld [vmem:[%s372 + $0x68] sm:$0xff]
        %v389 = vld [vmem:[%s372 + $0x70] sm:$0xff]
        %v390 = vld [vmem:[%s372 + $0x78] sm:$0xff]
        %v391 = vld [vmem:[%s2] sm:$0xff]
        %v392 = vld [vmem:[%s2 + $0x8] sm:$0xff]
        %v393 = vld [vmem:[%s2 + $0x10] sm:$0xff]
        %v394 = vld [vmem:[%s2 + $0x18] sm:$0xff]
        %v395 = vld [vmem:[%s3] sm:$0x1]
        %v397 = vlaneseq
        %v398 = vshrl.u32 %v397, 7
        %v399 = vsub.s32 0, %v398
        %v400 = vrot.slane %v395, %v399
        %vm402 = vcmask 261120
        %v404 = vsel %vm402, %v375, 0
        %v407 = vsel %vm402, %v376, 0
        %v410 = vsel %vm402, %v377, 0
        %v413 = vsel %vm402, %v378, 0
        %v416 = vsel %vm402, %v379, 0
        %v419 = vsel %vm402, %v380, 0
        %v422 = vsel %vm402, %v381, 0
        %v425 = vsel %vm402, %v382, 0
        %v428 = vsel %vm402, %v383, 0
        %v431 = vsel %vm402, %v384, 0
        %v434 = vsel %vm402, %v385, 0
        %v437 = vsel %vm402, %v386, 0
        %v440 = vsel %vm402, %v387, 0
        %v443 = vsel %vm402, %v388, 0
        %v446 = vsel %vm402, %v389, 0
        %v449 = vsel %vm402, %v390, 0
        %451 = vmatprep.subr.mxu0 0.0
        %452 = vmatpush1.msra.mxu0 0.0
        %453 = vmatprep.subr.mxu0 0.0
        %454 = vmatpush1.msra.mxu0 0.0
        %455 = vmatprep.subr.mxu0 0.0
        %456 = vmatpush1.msra.mxu0 0.0
        %457 = vmatprep.subr.mxu0 0.0
        %458 = vmatpush1.msra.mxu0 0.0
        %459 = vmatprep.subr.mxu0 0.0
        %460 = vmatpush1.msra.mxu0 0.0
        %461 = vmatprep.subr.mxu0 0.0
        %462 = vmatpush1.msra.mxu0 0.0
        %463 = vmatprep.subr.mxu0 0.0
        %464 = vmatpush1.msra.mxu0 0.0
        %465 = vmatprep.subr.mxu0 0.0
        %466 = vmatpush1.msra.mxu0 0.0
        %467 = vmatprep.subr.mxu0 0.0
        %468 = vmatpush1.msra.mxu0 0.0
        %469 = vmatprep.subr.mxu0 0.0
        %470 = vmatpush1.msra.mxu0 0.0
        %471 = vmatprep.subr.mxu0 0.0
        %472 = vmatpush1.msra.mxu0 0.0
        %473 = vmatprep.subr.mxu0 0.0
        %474 = vmatpush1.msra.mxu0 0.0
        %475 = vmatprep.subr.mxu0 0.0
        %476 = vmatpush1.msra.mxu0 %v394
        %477 = vmatprep.subr.mxu0 0.0
        %478 = vmatpush1.msra.mxu0 %v393
        %479 = vmatprep.subr.mxu0 0.0
        %480 = vmatpush1.msra.mxu0 %v392
        %481 = vmatprep.subr.mxu0 0.0
        %482 = vmatpush1.msra.mxu0 %v391
        %483 = vmatprep.subr.mxu0 0.0
        %484 = vmatpush2.msra.mxu0 0.0
        %485 = vmatprep.subr.mxu0 0.0
        %486 = vmatpush2.msra.mxu0 0.0
        %487 = vmatprep.subr.mxu0 0.0
        %488 = vmatpush2.msra.mxu0 0.0
        %489 = vmatprep.subr.mxu0 0.0
        %490 = vmatpush2.msra.mxu0 0.0
        %491 = vmatprep.subr.mxu0 0.0
        %492 = vmatpush2.msra.mxu0 0.0
        %493 = vmatprep.subr.mxu0 0.0
        %494 = vmatpush2.msra.mxu0 0.0
        %495 = vmatprep.subr.mxu0 0.0
        %496 = vmatpush2.msra.mxu0 0.0
        %497 = vmatprep.subr.mxu0 0.0
        %498 = vmatpush2.msra.mxu0 0.0
        %499 = vmatprep.subr.mxu0 0.0
        %500 = vmatpush2.msra.mxu0 0.0
        %501 = vmatprep.subr.mxu0 0.0
        %502 = vmatpush2.msra.mxu0 0.0
        %503 = vmatprep.subr.mxu0 0.0
        %504 = vmatpush2.msra.mxu0 0.0
        %505 = vmatprep.subr.mxu0 0.0
        %506 = vmatpush2.msra.mxu0 0.0
        %507 = vmatprep.subr.mxu0 0.0
        %508 = vmatpush2.msra.mxu0 0.0
        %509 = vmatprep.subr.mxu0 0.0
        %510 = vmatpush2.msra.mxu0 0.0
        %511 = vmatprep.subr.mxu0 0.0
        %512 = vmatpush2.msra.mxu0 0.0
        %513 = vmatprep.subr.mxu0 0.0
        %514 = vmatpush2.msra.mxu0 0.0
        %515 = vmatprep.mubr.f32.mxu0 0.0
        %516 = vmatmul.mubr.f32.gmra.mxu0 %v404
        %v517 = vpop.f32.mrf.mxu0
        %v518 = vadd.f32 %v400, %v517
        %v519 = vpop.f32.mrf.mxu0
        %520 = vmatprep.mubr.f32.mxu0 0.0
        %521 = vmatmul.mubr.f32.gmra.mxu0 %v407
        %v522 = vpop.f32.mrf.mxu0
        %v523 = vadd.f32 %v400, %v522
        %v524 = vpop.f32.mrf.mxu0
        %525 = vmatprep.mubr.f32.mxu0 0.0
        %526 = vmatmul.mubr.f32.gmra.mxu0 %v410
        %v527 = vpop.f32.mrf.mxu0
        %v528 = vadd.f32 %v400, %v527
        %v529 = vpop.f32.mrf.mxu0
        %530 = vmatprep.mubr.f32.mxu0 0.0
        %531 = vmatmul.mubr.f32.gmra.mxu0 %v413
        %v532 = vpop.f32.mrf.mxu0
        %v533 = vadd.f32 %v400, %v532
        %v534 = vpop.f32.mrf.mxu0
        %535 = vmatprep.mubr.f32.mxu0 0.0
        %536 = vmatmul.mubr.f32.gmra.mxu0 %v416
        %v537 = vpop.f32.mrf.mxu0
        %v538 = vadd.f32 %v400, %v537
        %v539 = vpop.f32.mrf.mxu0
        %540 = vmatprep.mubr.f32.mxu0 0.0
        %541 = vmatmul.mubr.f32.gmra.mxu0 %v419
        %v542 = vpop.f32.mrf.mxu0
        %v543 = vadd.f32 %v400, %v542
        %v544 = vpop.f32.mrf.mxu0
        %545 = vmatprep.mubr.f32.mxu0 0.0
        %546 = vmatmul.mubr.f32.gmra.mxu0 %v422
        %v547 = vpop.f32.mrf.mxu0
        %v548 = vadd.f32 %v400, %v547
        %v549 = vpop.f32.mrf.mxu0
        %550 = vmatprep.mubr.f32.mxu0 0.0
        %551 = vmatmul.mubr.f32.gmra.mxu0 %v425
        %v552 = vpop.f32.mrf.mxu0
        %v553 = vadd.f32 %v400, %v552
        %v554 = vpop.f32.mrf.mxu0
        %555 = vmatprep.mubr.f32.mxu0 0.0
        %556 = vmatmul.mubr.f32.gmra.mxu0 %v428
        %v557 = vpop.f32.mrf.mxu0
        %v558 = vadd.f32 %v400, %v557
        %v559 = vpop.f32.mrf.mxu0
        %560 = vmatprep.mubr.f32.mxu0 0.0
        %561 = vmatmul.mubr.f32.gmra.mxu0 %v431
        %v562 = vpop.f32.mrf.mxu0
        %v563 = vadd.f32 %v400, %v562
        %v564 = vpop.f32.mrf.mxu0
        %565 = vmatprep.mubr.f32.mxu0 0.0
        %566 = vmatmul.mubr.f32.gmra.mxu0 %v434
        %v567 = vpop.f32.mrf.mxu0
        %v568 = vadd.f32 %v400, %v567
        %v569 = vpop.f32.mrf.mxu0
        %570 = vmatprep.mubr.f32.mxu0 0.0
        %571 = vmatmul.mubr.f32.gmra.mxu0 %v437
        %v572 = vpop.f32.mrf.mxu0
        %v573 = vadd.f32 %v400, %v572
        %v574 = vpop.f32.mrf.mxu0
        %575 = vmatprep.mubr.f32.mxu0 0.0
        %576 = vmatmul.mubr.f32.gmra.mxu0 %v440
        %v577 = vpop.f32.mrf.mxu0
        %v578 = vadd.f32 %v400, %v577
        %v579 = vpop.f32.mrf.mxu0
        %580 = vmatprep.mubr.f32.mxu0 0.0
        %581 = vmatmul.mubr.f32.gmra.mxu0 %v443
        %v582 = vpop.f32.mrf.mxu0
        %v583 = vadd.f32 %v400, %v582
        %v584 = vpop.f32.mrf.mxu0
        %585 = vmatprep.mubr.f32.mxu0 0.0
        %586 = vmatmul.mubr.f32.gmra.mxu0 %v446
        %v587 = vpop.f32.mrf.mxu0
        %v588 = vadd.f32 %v400, %v587
        %v589 = vpop.f32.mrf.mxu0
        %590 = vmatprep.mubr.f32.mxu0 0.0
        %591 = vmatmul.mubr.f32.gmra.mxu0 %v449
        %v592 = vpop.f32.mrf.mxu0
        %v593 = vadd.f32 %v400, %v592
        %v594 = vpop.f32.mrf.mxu0
        %595 = vdwg.mxu0
        %s596 = sld [smem:[#allocation2]]
        %vm597 = vcmp.ge.f32.partialorder %v518, 0.0
        %vm598 = vcmp.ge.f32.partialorder %v523, 0.0
        %vm599 = vcmp.ge.f32.partialorder %v528, 0.0
        %vm600 = vcmp.ge.f32.partialorder %v533, 0.0
        %vm601 = vcmp.ge.f32.partialorder %v538, 0.0
        %vm602 = vcmp.ge.f32.partialorder %v543, 0.0
        %vm603 = vcmp.ge.f32.partialorder %v548, 0.0
        %vm604 = vcmp.ge.f32.partialorder %v553, 0.0
        %vm605 = vcmp.ge.f32.partialorder %v558, 0.0
        %vm606 = vcmp.ge.f32.partialorder %v563, 0.0
        %vm607 = vcmp.ge.f32.partialorder %v568, 0.0
        %vm608 = vcmp.ge.f32.partialorder %v573, 0.0
        %vm609 = vcmp.ge.f32.partialorder %v578, 0.0
        %vm610 = vcmp.ge.f32.partialorder %v583, 0.0
        %vm611 = vcmp.ge.f32.partialorder %v588, 0.0
        %vm612 = vcmp.ge.f32.partialorder %v593, 0.0
        %v613 = vstv %s596
        %v614 = vmul.f32 %v613, %v518
        %v615 = vmul.f32 %v613, %v523
        %v616 = vmul.f32 %v613, %v528
        %v617 = vmul.f32 %v613, %v533
        %v618 = vmul.f32 %v613, %v538
        %v619 = vmul.f32 %v613, %v543
        %v620 = vmul.f32 %v613, %v548
        %v621 = vmul.f32 %v613, %v553
        %v622 = vmul.f32 %v613, %v558
        %v623 = vmul.f32 %v613, %v563
        %v624 = vmul.f32 %v613, %v568
        %v625 = vmul.f32 %v613, %v573
        %v626 = vmul.f32 %v613, %v578
        %v627 = vmul.f32 %v613, %v583
        %v628 = vmul.f32 %v613, %v588
        %v629 = vmul.f32 %v613, %v593
        %v630 = vsel %vm597, %v518, %v614
        %v631 = vsel %vm598, %v523, %v615
        %v632 = vsel %vm599, %v528, %v616
        %v633 = vsel %vm600, %v533, %v617
        %v634 = vsel %vm601, %v538, %v618
        %v635 = vsel %vm602, %v543, %v619
        %v636 = vsel %vm603, %v548, %v620
        %v637 = vsel %vm604, %v553, %v621
        %v638 = vsel %vm605, %v558, %v622
        %v639 = vsel %vm606, %v563, %v623
        %v640 = vsel %vm607, %v568, %v624
        %v641 = vsel %vm608, %v573, %v625
        %v642 = vsel %vm609, %v578, %v626
        %v643 = vsel %vm610, %v583, %v627
        %v644 = vsel %vm611, %v588, %v628
        %v645 = vsel %vm612, %v593, %v629
        %v646 = vld [vmem:[%s4] sm:$0xff]
        %v647 = vld [vmem:[%s4 + $0x8] sm:$0xff]
        %v648 = vld [vmem:[%s4 + $0x10] sm:$0xff]
        %v649 = vld [vmem:[%s4 + $0x18] sm:$0xff]
        %v650 = vld [vmem:[%s4 + $0x20] sm:$0xff]
        %v651 = vld [vmem:[%s4 + $0x28] sm:$0xff]
        %v652 = vld [vmem:[%s4 + $0x30] sm:$0xff]
        %v653 = vld [vmem:[%s4 + $0x38] sm:$0xff]
        %v654 = vld [vmem:[%s4 + $0x40] sm:$0xff]
        %v655 = vld [vmem:[%s4 + $0x48] sm:$0xff]
        %v656 = vld [vmem:[%s4 + $0x50] sm:$0xff]
        %v657 = vld [vmem:[%s4 + $0x58] sm:$0xff]
        %v658 = vld [vmem:[%s4 + $0x60] sm:$0xff]
        %v659 = vld [vmem:[%s4 + $0x68] sm:$0xff]
        %v660 = vld [vmem:[%s4 + $0x70] sm:$0xff]
        %v661 = vld [vmem:[%s4 + $0x78] sm:$0xff]
        %v662 = vld [vmem:[%s5] sm:$0x1]
        %v664 = vlaneseq
        %v665 = vshrl.u32 %v664, 7
        %v666 = vsub.s32 0, %v665
        %v667 = vrot.slane %v662, %v666
        %669 = vmatprep.subr.mxu0 0.0
        %670 = vmatpush1.msra.mxu0 %v661
        %671 = vmatprep.subr.mxu0 0.0
        %672 = vmatpush1.msra.mxu0 %v660
        %673 = vmatprep.subr.mxu0 0.0
        %674 = vmatpush1.msra.mxu0 %v659
        %675 = vmatprep.subr.mxu0 0.0
        %676 = vmatpush1.msra.mxu0 %v658
        %677 = vmatprep.subr.mxu0 0.0
        %678 = vmatpush1.msra.mxu0 %v657
        %679 = vmatprep.subr.mxu0 0.0
        %680 = vmatpush1.msra.mxu0 %v656
        %681 = vmatprep.subr.mxu0 0.0
        %682 = vmatpush1.msra.mxu0 %v655
        %683 = vmatprep.subr.mxu0 0.0
        %684 = vmatpush1.msra.mxu0 %v654
        %685 = vmatprep.subr.mxu0 0.0
        %686 = vmatpush1.msra.mxu0 %v653
        %687 = vmatprep.subr.mxu0 0.0
        %688 = vmatpush1.msra.mxu0 %v652
        %689 = vmatprep.subr.mxu0 0.0
        %690 = vmatpush1.msra.mxu0 %v651
        %691 = vmatprep.subr.mxu0 0.0
        %692 = vmatpush1.msra.mxu0 %v650
        %693 = vmatprep.subr.mxu0 0.0
        %694 = vmatpush1.msra.mxu0 %v649
        %695 = vmatprep.subr.mxu0 0.0
        %696 = vmatpush1.msra.mxu0 %v648
        %697 = vmatprep.subr.mxu0 0.0
        %698 = vmatpush1.msra.mxu0 %v647
        %699 = vmatprep.subr.mxu0 0.0
        %700 = vmatpush1.msra.mxu0 %v646
        %701 = vmatprep.subr.mxu0 0.0
        %702 = vmatpush2.msra.mxu0 0.0
        %703 = vmatprep.subr.mxu0 0.0
        %704 = vmatpush2.msra.mxu0 0.0
        %705 = vmatprep.subr.mxu0 0.0
        %706 = vmatpush2.msra.mxu0 0.0
        %707 = vmatprep.subr.mxu0 0.0
        %708 = vmatpush2.msra.mxu0 0.0
        %709 = vmatprep.subr.mxu0 0.0
        %710 = vmatpush2.msra.mxu0 0.0
        %711 = vmatprep.subr.mxu0 0.0
        %712 = vmatpush2.msra.mxu0 0.0
        %713 = vmatprep.subr.mxu0 0.0
        %714 = vmatpush2.msra.mxu0 0.0
        %715 = vmatprep.subr.mxu0 0.0
        %716 = vmatpush2.msra.mxu0 0.0
        %717 = vmatprep.subr.mxu0 0.0
        %718 = vmatpush2.msra.mxu0 0.0
        %719 = vmatprep.subr.mxu0 0.0
        %720 = vmatpush2.msra.mxu0 0.0
        %721 = vmatprep.subr.mxu0 0.0
        %722 = vmatpush2.msra.mxu0 0.0
        %723 = vmatprep.subr.mxu0 0.0
        %724 = vmatpush2.msra.mxu0 0.0
        %725 = vmatprep.subr.mxu0 0.0
        %726 = vmatpush2.msra.mxu0 0.0
        %727 = vmatprep.subr.mxu0 0.0
        %728 = vmatpush2.msra.mxu0 0.0
        %729 = vmatprep.subr.mxu0 0.0
        %730 = vmatpush2.msra.mxu0 0.0
        %731 = vmatprep.subr.mxu0 0.0
        %732 = vmatpush2.msra.mxu0 0.0
        %733 = vmatprep.mubr.f32.mxu0 0.0
        %734 = vmatmul.mubr.f32.gmra.mxu0 %v630
        %v735 = vpop.f32.mrf.mxu0
        %v736 = vadd.f32 %v667, %v735
        %v737 = vpop.f32.mrf.mxu0
        %738 = vmatprep.mubr.f32.mxu0 0.0
        %739 = vmatmul.mubr.f32.gmra.mxu0 %v631
        %v740 = vpop.f32.mrf.mxu0
        %v741 = vadd.f32 %v667, %v740
        %v742 = vpop.f32.mrf.mxu0
        %743 = vmatprep.mubr.f32.mxu0 0.0
        %744 = vmatmul.mubr.f32.gmra.mxu0 %v632
        %v745 = vpop.f32.mrf.mxu0
        %v746 = vadd.f32 %v667, %v745
        %v747 = vpop.f32.mrf.mxu0
        %748 = vmatprep.mubr.f32.mxu0 0.0
        %749 = vmatmul.mubr.f32.gmra.mxu0 %v633
        %v750 = vpop.f32.mrf.mxu0
        %v751 = vadd.f32 %v667, %v750
        %v752 = vpop.f32.mrf.mxu0
        %753 = vmatprep.mubr.f32.mxu0 0.0
        %754 = vmatmul.mubr.f32.gmra.mxu0 %v634
        %v755 = vpop.f32.mrf.mxu0
        %v756 = vadd.f32 %v667, %v755
        %v757 = vpop.f32.mrf.mxu0
        %758 = vmatprep.mubr.f32.mxu0 0.0
        %759 = vmatmul.mubr.f32.gmra.mxu0 %v635
        %v760 = vpop.f32.mrf.mxu0
        %v761 = vadd.f32 %v667, %v760
        %v762 = vpop.f32.mrf.mxu0
        %763 = vmatprep.mubr.f32.mxu0 0.0
        %764 = vmatmul.mubr.f32.gmra.mxu0 %v636
        %v765 = vpop.f32.mrf.mxu0
        %v766 = vadd.f32 %v667, %v765
        %v767 = vpop.f32.mrf.mxu0
        %768 = vmatprep.mubr.f32.mxu0 0.0
        %769 = vmatmul.mubr.f32.gmra.mxu0 %v637
        %v770 = vpop.f32.mrf.mxu0
        %v771 = vadd.f32 %v667, %v770
        %v772 = vpop.f32.mrf.mxu0
        %773 = vmatprep.mubr.f32.mxu0 0.0
        %774 = vmatmul.mubr.f32.gmra.mxu0 %v638
        %v775 = vpop.f32.mrf.mxu0
        %v776 = vadd.f32 %v667, %v775
        %v777 = vpop.f32.mrf.mxu0
        %778 = vmatprep.mubr.f32.mxu0 0.0
        %779 = vmatmul.mubr.f32.gmra.mxu0 %v639
        %v780 = vpop.f32.mrf.mxu0
        %v781 = vadd.f32 %v667, %v780
        %v782 = vpop.f32.mrf.mxu0
        %783 = vmatprep.mubr.f32.mxu0 0.0
        %784 = vmatmul.mubr.f32.gmra.mxu0 %v640
        %v785 = vpop.f32.mrf.mxu0
        %v786 = vadd.f32 %v667, %v785
        %v787 = vpop.f32.mrf.mxu0
        %788 = vmatprep.mubr.f32.mxu0 0.0
        %789 = vmatmul.mubr.f32.gmra.mxu0 %v641
        %v790 = vpop.f32.mrf.mxu0
        %v791 = vadd.f32 %v667, %v790
        %v792 = vpop.f32.mrf.mxu0
        %793 = vmatprep.mubr.f32.mxu0 0.0
        %794 = vmatmul.mubr.f32.gmra.mxu0 %v642
        %v795 = vpop.f32.mrf.mxu0
        %v796 = vadd.f32 %v667, %v795
        %v797 = vpop.f32.mrf.mxu0
        %798 = vmatprep.mubr.f32.mxu0 0.0
        %799 = vmatmul.mubr.f32.gmra.mxu0 %v643
        %v800 = vpop.f32.mrf.mxu0
        %v801 = vadd.f32 %v667, %v800
        %v802 = vpop.f32.mrf.mxu0
        %803 = vmatprep.mubr.f32.mxu0 0.0
        %804 = vmatmul.mubr.f32.gmra.mxu0 %v644
        %v805 = vpop.f32.mrf.mxu0
        %v806 = vadd.f32 %v667, %v805
        %v807 = vpop.f32.mrf.mxu0
        %808 = vmatprep.mubr.f32.mxu0 0.0
        %809 = vmatmul.mubr.f32.gmra.mxu0 %v645
        %v810 = vpop.f32.mrf.mxu0
        %v811 = vadd.f32 %v667, %v810
        %v812 = vpop.f32.mrf.mxu0
        %813 = vdwg.mxu0
        %s814 = sld [smem:[#allocation2 + $0x1]]
        %vm815 = vcmp.ge.f32.partialorder %v736, 0.0
        %vm816 = vcmp.ge.f32.partialorder %v741, 0.0
        %vm817 = vcmp.ge.f32.partialorder %v746, 0.0
        %vm818 = vcmp.ge.f32.partialorder %v751, 0.0
        %vm819 = vcmp.ge.f32.partialorder %v756, 0.0
        %vm820 = vcmp.ge.f32.partialorder %v761, 0.0
        %vm821 = vcmp.ge.f32.partialorder %v766, 0.0
        %vm822 = vcmp.ge.f32.partialorder %v771, 0.0
        %vm823 = vcmp.ge.f32.partialorder %v776, 0.0
        %vm824 = vcmp.ge.f32.partialorder %v781, 0.0
        %vm825 = vcmp.ge.f32.partialorder %v786, 0.0
        %vm826 = vcmp.ge.f32.partialorder %v791, 0.0
        %vm827 = vcmp.ge.f32.partialorder %v796, 0.0
        %vm828 = vcmp.ge.f32.partialorder %v801, 0.0
        %vm829 = vcmp.ge.f32.partialorder %v806, 0.0
        %vm830 = vcmp.ge.f32.partialorder %v811, 0.0
        %v831 = vstv %s814
        %v832 = vmul.f32 %v831, %v736
        %v833 = vmul.f32 %v831, %v741
        %v834 = vmul.f32 %v831, %v746
        %v835 = vmul.f32 %v831, %v751
        %v836 = vmul.f32 %v831, %v756
        %v837 = vmul.f32 %v831, %v761
        %v838 = vmul.f32 %v831, %v766
        %v839 = vmul.f32 %v831, %v771
        %v840 = vmul.f32 %v831, %v776
        %v841 = vmul.f32 %v831, %v781
        %v842 = vmul.f32 %v831, %v786
        %v843 = vmul.f32 %v831, %v791
        %v844 = vmul.f32 %v831, %v796
        %v845 = vmul.f32 %v831, %v801
        %v846 = vmul.f32 %v831, %v806
        %v847 = vmul.f32 %v831, %v811
        %v848 = vsel %vm815, %v736, %v832
        %v849 = vsel %vm816, %v741, %v833
        %v850 = vsel %vm817, %v746, %v834
        %v851 = vsel %vm818, %v751, %v835
        %v852 = vsel %vm819, %v756, %v836
        %v853 = vsel %vm820, %v761, %v837
        %v854 = vsel %vm821, %v766, %v838
        %v855 = vsel %vm822, %v771, %v839
        %v856 = vsel %vm823, %v776, %v840
        %v857 = vsel %vm824, %v781, %v841
        %v858 = vsel %vm825, %v786, %v842
        %v859 = vsel %vm826, %v791, %v843
        %v860 = vsel %vm827, %v796, %v844
        %v861 = vsel %vm828, %v801, %v845
        %v862 = vsel %vm829, %v806, %v846
        %v863 = vsel %vm830, %v811, %v847
        %v864 = vld [vmem:[%s6] sm:$0xff]
        %v865 = vld [vmem:[%s6 + $0x8] sm:$0xff]
        %v866 = vld [vmem:[%s6 + $0x10] sm:$0xff]
        %v867 = vld [vmem:[%s6 + $0x18] sm:$0xff]
        %v868 = vld [vmem:[%s6 + $0x20] sm:$0xff]
        %v869 = vld [vmem:[%s6 + $0x28] sm:$0xff]
        %v870 = vld [vmem:[%s6 + $0x30] sm:$0xff]
        %v871 = vld [vmem:[%s6 + $0x38] sm:$0xff]
        %v872 = vld [vmem:[%s6 + $0x40] sm:$0xff]
        %v873 = vld [vmem:[%s6 + $0x48] sm:$0xff]
        %v874 = vld [vmem:[%s6 + $0x50] sm:$0xff]
        %v875 = vld [vmem:[%s6 + $0x58] sm:$0xff]
        %v876 = vld [vmem:[%s6 + $0x60] sm:$0xff]
        %v877 = vld [vmem:[%s6 + $0x68] sm:$0xff]
        %v878 = vld [vmem:[%s6 + $0x70] sm:$0xff]
        %v879 = vld [vmem:[%s6 + $0x78] sm:$0xff]
        %v880 = vld [vmem:[%s7] sm:$0x1]
        %v882 = vlaneseq
        %v883 = vshrl.u32 %v882, 7
        %v884 = vsub.s32 0, %v883
        %v885 = vrot.slane %v880, %v884
        %887 = vmatprep.subr.mxu0 0.0
        %888 = vmatpush1.msra.mxu0 %v879
        %889 = vmatprep.subr.mxu0 0.0
        %890 = vmatpush1.msra.mxu0 %v878
        %891 = vmatprep.subr.mxu0 0.0
        %892 = vmatpush1.msra.mxu0 %v877
        %893 = vmatprep.subr.mxu0 0.0
        %894 = vmatpush1.msra.mxu0 %v876
        %895 = vmatprep.subr.mxu0 0.0
        %896 = vmatpush1.msra.mxu0 %v875
        %897 = vmatprep.subr.mxu0 0.0
        %898 = vmatpush1.msra.mxu0 %v874
        %899 = vmatprep.subr.mxu0 0.0
        %900 = vmatpush1.msra.mxu0 %v873
        %901 = vmatprep.subr.mxu0 0.0
        %902 = vmatpush1.msra.mxu0 %v872
        %903 = vmatprep.subr.mxu0 0.0
        %904 = vmatpush1.msra.mxu0 %v871
        %905 = vmatprep.subr.mxu0 0.0
        %906 = vmatpush1.msra.mxu0 %v870
        %907 = vmatprep.subr.mxu0 0.0
        %908 = vmatpush1.msra.mxu0 %v869
        %909 = vmatprep.subr.mxu0 0.0
        %910 = vmatpush1.msra.mxu0 %v868
        %911 = vmatprep.subr.mxu0 0.0
        %912 = vmatpush1.msra.mxu0 %v867
        %913 = vmatprep.subr.mxu0 0.0
        %914 = vmatpush1.msra.mxu0 %v866
        %915 = vmatprep.subr.mxu0 0.0
        %916 = vmatpush1.msra.mxu0 %v865
        %917 = vmatprep.subr.mxu0 0.0
        %918 = vmatpush1.msra.mxu0 %v864
        %919 = vmatprep.subr.mxu0 0.0
        %920 = vmatpush2.msra.mxu0 0.0
        %921 = vmatprep.subr.mxu0 0.0
        %922 = vmatpush2.msra.mxu0 0.0
        %923 = vmatprep.subr.mxu0 0.0
        %924 = vmatpush2.msra.mxu0 0.0
        %925 = vmatprep.subr.mxu0 0.0
        %926 = vmatpush2.msra.mxu0 0.0
        %927 = vmatprep.subr.mxu0 0.0
        %928 = vmatpush2.msra.mxu0 0.0
        %929 = vmatprep.subr.mxu0 0.0
        %930 = vmatpush2.msra.mxu0 0.0
        %931 = vmatprep.subr.mxu0 0.0
        %932 = vmatpush2.msra.mxu0 0.0
        %933 = vmatprep.subr.mxu0 0.0
        %934 = vmatpush2.msra.mxu0 0.0
        %935 = vmatprep.subr.mxu0 0.0
        %936 = vmatpush2.msra.mxu0 0.0
        %937 = vmatprep.subr.mxu0 0.0
        %938 = vmatpush2.msra.mxu0 0.0
        %939 = vmatprep.subr.mxu0 0.0
        %940 = vmatpush2.msra.mxu0 0.0
        %941 = vmatprep.subr.mxu0 0.0
        %942 = vmatpush2.msra.mxu0 0.0
        %943 = vmatprep.subr.mxu0 0.0
        %944 = vmatpush2.msra.mxu0 0.0
        %945 = vmatprep.subr.mxu0 0.0
        %946 = vmatpush2.msra.mxu0 0.0
        %947 = vmatprep.subr.mxu0 0.0
        %948 = vmatpush2.msra.mxu0 0.0
        %949 = vmatprep.subr.mxu0 0.0
        %950 = vmatpush2.msra.mxu0 0.0
        %951 = vmatprep.mubr.f32.mxu0 0.0
        %952 = vmatmul.mubr.f32.gmra.mxu0 %v848
        %v953 = vpop.f32.mrf.mxu0
        %v954 = vadd.f32 %v885, %v953
        %v955 = vpop.f32.mrf.mxu0
        %956 = vmatprep.mubr.f32.mxu0 0.0
        %957 = vmatmul.mubr.f32.gmra.mxu0 %v849
        %v958 = vpop.f32.mrf.mxu0
        %v959 = vadd.f32 %v885, %v958
        %v960 = vpop.f32.mrf.mxu0
        %961 = vmatprep.mubr.f32.mxu0 0.0
        %962 = vmatmul.mubr.f32.gmra.mxu0 %v850
        %v963 = vpop.f32.mrf.mxu0
        %v964 = vadd.f32 %v885, %v963
        %v965 = vpop.f32.mrf.mxu0
        %966 = vmatprep.mubr.f32.mxu0 0.0
        %967 = vmatmul.mubr.f32.gmra.mxu0 %v851
        %v968 = vpop.f32.mrf.mxu0
        %v969 = vadd.f32 %v885, %v968
        %v970 = vpop.f32.mrf.mxu0
        %971 = vmatprep.mubr.f32.mxu0 0.0
        %972 = vmatmul.mubr.f32.gmra.mxu0 %v852
        %v973 = vpop.f32.mrf.mxu0
        %v974 = vadd.f32 %v885, %v973
        %v975 = vpop.f32.mrf.mxu0
        %976 = vmatprep.mubr.f32.mxu0 0.0
        %977 = vmatmul.mubr.f32.gmra.mxu0 %v853
        %v978 = vpop.f32.mrf.mxu0
        %v979 = vadd.f32 %v885, %v978
        %v980 = vpop.f32.mrf.mxu0
        %981 = vmatprep.mubr.f32.mxu0 0.0
        %982 = vmatmul.mubr.f32.gmra.mxu0 %v854
        %v983 = vpop.f32.mrf.mxu0
        %v984 = vadd.f32 %v885, %v983
        %v985 = vpop.f32.mrf.mxu0
        %986 = vmatprep.mubr.f32.mxu0 0.0
        %987 = vmatmul.mubr.f32.gmra.mxu0 %v855
        %v988 = vpop.f32.mrf.mxu0
        %v989 = vadd.f32 %v885, %v988
        %v990 = vpop.f32.mrf.mxu0
        %991 = vmatprep.mubr.f32.mxu0 0.0
        %992 = vmatmul.mubr.f32.gmra.mxu0 %v856
        %v993 = vpop.f32.mrf.mxu0
        %v994 = vadd.f32 %v885, %v993
        %v995 = vpop.f32.mrf.mxu0
        %996 = vmatprep.mubr.f32.mxu0 0.0
        %997 = vmatmul.mubr.f32.gmra.mxu0 %v857
        %v998 = vpop.f32.mrf.mxu0
        %v999 = vadd.f32 %v885, %v998
        %v1000 = vpop.f32.mrf.mxu0
        %1001 = vmatprep.mubr.f32.mxu0 0.0
        %1002 = vmatmul.mubr.f32.gmra.mxu0 %v858
        %v1003 = vpop.f32.mrf.mxu0
        %v1004 = vadd.f32 %v885, %v1003
        %v1005 = vpop.f32.mrf.mxu0
        %1006 = vmatprep.mubr.f32.mxu0 0.0
        %1007 = vmatmul.mubr.f32.gmra.mxu0 %v859
        %v1008 = vpop.f32.mrf.mxu0
        %v1009 = vadd.f32 %v885, %v1008
        %v1010 = vpop.f32.mrf.mxu0
        %1011 = vmatprep.mubr.f32.mxu0 0.0
        %1012 = vmatmul.mubr.f32.gmra.mxu0 %v860
        %v1013 = vpop.f32.mrf.mxu0
        %v1014 = vadd.f32 %v885, %v1013
        %v1015 = vpop.f32.mrf.mxu0
        %1016 = vmatprep.mubr.f32.mxu0 0.0
        %1017 = vmatmul.mubr.f32.gmra.mxu0 %v861
        %v1018 = vpop.f32.mrf.mxu0
        %v1019 = vadd.f32 %v885, %v1018
        %v1020 = vpop.f32.mrf.mxu0
        %1021 = vmatprep.mubr.f32.mxu0 0.0
        %1022 = vmatmul.mubr.f32.gmra.mxu0 %v862
        %v1023 = vpop.f32.mrf.mxu0
        %v1024 = vadd.f32 %v885, %v1023
        %v1025 = vpop.f32.mrf.mxu0
        %1026 = vmatprep.mubr.f32.mxu0 0.0
        %1027 = vmatmul.mubr.f32.gmra.mxu0 %v863
        %v1028 = vpop.f32.mrf.mxu0
        %v1029 = vadd.f32 %v885, %v1028
        %v1030 = vpop.f32.mrf.mxu0
        %1031 = vdwg.mxu0
        %s1032 = sld [smem:[#allocation2 + $0x2]]
        %vm1033 = vcmp.ge.f32.partialorder %v954, 0.0
        %vm1034 = vcmp.ge.f32.partialorder %v959, 0.0
        %vm1035 = vcmp.ge.f32.partialorder %v964, 0.0
        %vm1036 = vcmp.ge.f32.partialorder %v969, 0.0
        %vm1037 = vcmp.ge.f32.partialorder %v974, 0.0
        %vm1038 = vcmp.ge.f32.partialorder %v979, 0.0
        %vm1039 = vcmp.ge.f32.partialorder %v984, 0.0
        %vm1040 = vcmp.ge.f32.partialorder %v989, 0.0
        %vm1041 = vcmp.ge.f32.partialorder %v994, 0.0
        %vm1042 = vcmp.ge.f32.partialorder %v999, 0.0
        %vm1043 = vcmp.ge.f32.partialorder %v1004, 0.0
        %vm1044 = vcmp.ge.f32.partialorder %v1009, 0.0
        %vm1045 = vcmp.ge.f32.partialorder %v1014, 0.0
        %vm1046 = vcmp.ge.f32.partialorder %v1019, 0.0
        %vm1047 = vcmp.ge.f32.partialorder %v1024, 0.0
        %vm1048 = vcmp.ge.f32.partialorder %v1029, 0.0
        %v1049 = vstv %s1032
        %v1050 = vmul.f32 %v1049, %v954
        %v1051 = vmul.f32 %v1049, %v959
        %v1052 = vmul.f32 %v1049, %v964
        %v1053 = vmul.f32 %v1049, %v969
        %v1054 = vmul.f32 %v1049, %v974
        %v1055 = vmul.f32 %v1049, %v979
        %v1056 = vmul.f32 %v1049, %v984
        %v1057 = vmul.f32 %v1049, %v989
        %v1058 = vmul.f32 %v1049, %v994
        %v1059 = vmul.f32 %v1049, %v999
        %v1060 = vmul.f32 %v1049, %v1004
        %v1061 = vmul.f32 %v1049, %v1009
        %v1062 = vmul.f32 %v1049, %v1014
        %v1063 = vmul.f32 %v1049, %v1019
        %v1064 = vmul.f32 %v1049, %v1024
        %v1065 = vmul.f32 %v1049, %v1029
        %v1066 = vsel %vm1033, %v954, %v1050
        %v1067 = vsel %vm1034, %v959, %v1051
        %v1068 = vsel %vm1035, %v964, %v1052
        %v1069 = vsel %vm1036, %v969, %v1053
        %v1070 = vsel %vm1037, %v974, %v1054
        %v1071 = vsel %vm1038, %v979, %v1055
        %v1072 = vsel %vm1039, %v984, %v1056
        %v1073 = vsel %vm1040, %v989, %v1057
        %v1074 = vsel %vm1041, %v994, %v1058
        %v1075 = vsel %vm1042, %v999, %v1059
        %v1076 = vsel %vm1043, %v1004, %v1060
        %v1077 = vsel %vm1044, %v1009, %v1061
        %v1078 = vsel %vm1045, %v1014, %v1062
        %v1079 = vsel %vm1046, %v1019, %v1063
        %v1080 = vsel %vm1047, %v1024, %v1064
        %v1081 = vsel %vm1048, %v1029, %v1065
        %v1082 = vld [vmem:[%s8] sm:$0xff]
        %v1083 = vld [vmem:[%s8 + $0x8] sm:$0xff]
        %v1084 = vld [vmem:[%s8 + $0x10] sm:$0xff]
        %v1085 = vld [vmem:[%s8 + $0x18] sm:$0xff]
        %v1086 = vld [vmem:[%s8 + $0x20] sm:$0xff]
        %v1087 = vld [vmem:[%s8 + $0x28] sm:$0xff]
        %v1088 = vld [vmem:[%s8 + $0x30] sm:$0xff]
        %v1089 = vld [vmem:[%s8 + $0x38] sm:$0xff]
        %v1090 = vld [vmem:[%s8 + $0x40] sm:$0xff]
        %v1091 = vld [vmem:[%s8 + $0x48] sm:$0xff]
        %v1092 = vld [vmem:[%s8 + $0x50] sm:$0xff]
        %v1093 = vld [vmem:[%s8 + $0x58] sm:$0xff]
        %v1094 = vld [vmem:[%s8 + $0x60] sm:$0xff]
        %v1095 = vld [vmem:[%s8 + $0x68] sm:$0xff]
        %v1096 = vld [vmem:[%s8 + $0x70] sm:$0xff]
        %v1097 = vld [vmem:[%s8 + $0x78] sm:$0xff]
        %v1098 = vld [vmem:[%s9] sm:$0x1]
        %v1100 = vlaneseq
        %v1101 = vshrl.u32 %v1100, 7
        %v1102 = vsub.s32 0, %v1101
        %v1103 = vrot.slane %v1098, %v1102
        %1105 = vmatprep.subr.mxu0 0.0
        %1106 = vmatpush1.msra.mxu0 %v1097
        %1107 = vmatprep.subr.mxu0 0.0
        %1108 = vmatpush1.msra.mxu0 %v1096
        %1109 = vmatprep.subr.mxu0 0.0
        %1110 = vmatpush1.msra.mxu0 %v1095
        %1111 = vmatprep.subr.mxu0 0.0
        %1112 = vmatpush1.msra.mxu0 %v1094
        %1113 = vmatprep.subr.mxu0 0.0
        %1114 = vmatpush1.msra.mxu0 %v1093
        %1115 = vmatprep.subr.mxu0 0.0
        %1116 = vmatpush1.msra.mxu0 %v1092
        %1117 = vmatprep.subr.mxu0 0.0
        %1118 = vmatpush1.msra.mxu0 %v1091
        %1119 = vmatprep.subr.mxu0 0.0
        %1120 = vmatpush1.msra.mxu0 %v1090
        %1121 = vmatprep.subr.mxu0 0.0
        %1122 = vmatpush1.msra.mxu0 %v1089
        %1123 = vmatprep.subr.mxu0 0.0
        %1124 = vmatpush1.msra.mxu0 %v1088
        %1125 = vmatprep.subr.mxu0 0.0
        %1126 = vmatpush1.msra.mxu0 %v1087
        %1127 = vmatprep.subr.mxu0 0.0
        %1128 = vmatpush1.msra.mxu0 %v1086
        %1129 = vmatprep.subr.mxu0 0.0
        %1130 = vmatpush1.msra.mxu0 %v1085
        %1131 = vmatprep.subr.mxu0 0.0
        %1132 = vmatpush1.msra.mxu0 %v1084
        %1133 = vmatprep.subr.mxu0 0.0
        %1134 = vmatpush1.msra.mxu0 %v1083
        %1135 = vmatprep.subr.mxu0 0.0
        %1136 = vmatpush1.msra.mxu0 %v1082
        %1137 = vmatprep.subr.mxu0 0.0
        %1138 = vmatpush2.msra.mxu0 0.0
        %1139 = vmatprep.subr.mxu0 0.0
        %1140 = vmatpush2.msra.mxu0 0.0
        %1141 = vmatprep.subr.mxu0 0.0
        %1142 = vmatpush2.msra.mxu0 0.0
        %1143 = vmatprep.subr.mxu0 0.0
        %1144 = vmatpush2.msra.mxu0 0.0
        %1145 = vmatprep.subr.mxu0 0.0
        %1146 = vmatpush2.msra.mxu0 0.0
        %1147 = vmatprep.subr.mxu0 0.0
        %1148 = vmatpush2.msra.mxu0 0.0
        %1149 = vmatprep.subr.mxu0 0.0
        %1150 = vmatpush2.msra.mxu0 0.0
        %1151 = vmatprep.subr.mxu0 0.0
        %1152 = vmatpush2.msra.mxu0 0.0
        %1153 = vmatprep.subr.mxu0 0.0
        %1154 = vmatpush2.msra.mxu0 0.0
        %1155 = vmatprep.subr.mxu0 0.0
        %1156 = vmatpush2.msra.mxu0 0.0
        %1157 = vmatprep.subr.mxu0 0.0
        %1158 = vmatpush2.msra.mxu0 0.0
        %1159 = vmatprep.subr.mxu0 0.0
        %1160 = vmatpush2.msra.mxu0 0.0
        %1161 = vmatprep.subr.mxu0 0.0
        %1162 = vmatpush2.msra.mxu0 0.0
        %1163 = vmatprep.subr.mxu0 0.0
        %1164 = vmatpush2.msra.mxu0 0.0
        %1165 = vmatprep.subr.mxu0 0.0
        %1166 = vmatpush2.msra.mxu0 0.0
        %1167 = vmatprep.subr.mxu0 0.0
        %1168 = vmatpush2.msra.mxu0 0.0
        %1169 = vmatprep.mubr.f32.mxu0 0.0
        %1170 = vmatmul.mubr.f32.gmra.mxu0 %v1066
        %v1171 = vpop.f32.mrf.mxu0
        %v1172 = vadd.f32 %v1103, %v1171
        %v1173 = vpop.f32.mrf.mxu0
        %1174 = vmatprep.mubr.f32.mxu0 0.0
        %1175 = vmatmul.mubr.f32.gmra.mxu0 %v1067
        %v1176 = vpop.f32.mrf.mxu0
        %v1177 = vadd.f32 %v1103, %v1176
        %v1178 = vpop.f32.mrf.mxu0
        %1179 = vmatprep.mubr.f32.mxu0 0.0
        %1180 = vmatmul.mubr.f32.gmra.mxu0 %v1068
        %v1181 = vpop.f32.mrf.mxu0
        %v1182 = vadd.f32 %v1103, %v1181
        %v1183 = vpop.f32.mrf.mxu0
        %1184 = vmatprep.mubr.f32.mxu0 0.0
        %1185 = vmatmul.mubr.f32.gmra.mxu0 %v1069
        %v1186 = vpop.f32.mrf.mxu0
        %v1187 = vadd.f32 %v1103, %v1186
        %v1188 = vpop.f32.mrf.mxu0
        %1189 = vmatprep.mubr.f32.mxu0 0.0
        %1190 = vmatmul.mubr.f32.gmra.mxu0 %v1070
        %v1191 = vpop.f32.mrf.mxu0
        %v1192 = vadd.f32 %v1103, %v1191
        %v1193 = vpop.f32.mrf.mxu0
        %1194 = vmatprep.mubr.f32.mxu0 0.0
        %1195 = vmatmul.mubr.f32.gmra.mxu0 %v1071
        %v1196 = vpop.f32.mrf.mxu0
        %v1197 = vadd.f32 %v1103, %v1196
        %v1198 = vpop.f32.mrf.mxu0
        %1199 = vmatprep.mubr.f32.mxu0 0.0
        %1200 = vmatmul.mubr.f32.gmra.mxu0 %v1072
        %v1201 = vpop.f32.mrf.mxu0
        %v1202 = vadd.f32 %v1103, %v1201
        %v1203 = vpop.f32.mrf.mxu0
        %1204 = vmatprep.mubr.f32.mxu0 0.0
        %1205 = vmatmul.mubr.f32.gmra.mxu0 %v1073
        %v1206 = vpop.f32.mrf.mxu0
        %v1207 = vadd.f32 %v1103, %v1206
        %v1208 = vpop.f32.mrf.mxu0
        %1209 = vmatprep.mubr.f32.mxu0 0.0
        %1210 = vmatmul.mubr.f32.gmra.mxu0 %v1074
        %v1211 = vpop.f32.mrf.mxu0
        %v1212 = vadd.f32 %v1103, %v1211
        %v1213 = vpop.f32.mrf.mxu0
        %1214 = vmatprep.mubr.f32.mxu0 0.0
        %1215 = vmatmul.mubr.f32.gmra.mxu0 %v1075
        %v1216 = vpop.f32.mrf.mxu0
        %v1217 = vadd.f32 %v1103, %v1216
        %v1218 = vpop.f32.mrf.mxu0
        %1219 = vmatprep.mubr.f32.mxu0 0.0
        %1220 = vmatmul.mubr.f32.gmra.mxu0 %v1076
        %v1221 = vpop.f32.mrf.mxu0
        %v1222 = vadd.f32 %v1103, %v1221
        %v1223 = vpop.f32.mrf.mxu0
        %1224 = vmatprep.mubr.f32.mxu0 0.0
        %1225 = vmatmul.mubr.f32.gmra.mxu0 %v1077
        %v1226 = vpop.f32.mrf.mxu0
        %v1227 = vadd.f32 %v1103, %v1226
        %v1228 = vpop.f32.mrf.mxu0
        %1229 = vmatprep.mubr.f32.mxu0 0.0
        %1230 = vmatmul.mubr.f32.gmra.mxu0 %v1078
        %v1231 = vpop.f32.mrf.mxu0
        %v1232 = vadd.f32 %v1103, %v1231
        %v1233 = vpop.f32.mrf.mxu0
        %1234 = vmatprep.mubr.f32.mxu0 0.0
        %1235 = vmatmul.mubr.f32.gmra.mxu0 %v1079
        %v1236 = vpop.f32.mrf.mxu0
        %v1237 = vadd.f32 %v1103, %v1236
        %v1238 = vpop.f32.mrf.mxu0
        %1239 = vmatprep.mubr.f32.mxu0 0.0
        %1240 = vmatmul.mubr.f32.gmra.mxu0 %v1080
        %v1241 = vpop.f32.mrf.mxu0
        %v1242 = vadd.f32 %v1103, %v1241
        %v1243 = vpop.f32.mrf.mxu0
        %1244 = vmatprep.mubr.f32.mxu0 0.0
        %1245 = vmatmul.mubr.f32.gmra.mxu0 %v1081
        %v1246 = vpop.f32.mrf.mxu0
        %v1247 = vadd.f32 %v1103, %v1246
        %v1248 = vpop.f32.mrf.mxu0
        %1249 = vdwg.mxu0
        %1250 = vmax.xlane.f32.xlu0 %v1172
        %v1251 = vpop.xlane.xlu0 %1250
        %1252 = vmax.xlane.f32.xlu0 %v1177
        %v1253 = vpop.xlane.xlu0 %1252
        %1254 = vmax.xlane.f32.xlu0 %v1182
        %v1255 = vpop.xlane.xlu0 %1254
        %1256 = vmax.xlane.f32.xlu0 %v1187
        %v1257 = vpop.xlane.xlu0 %1256
        %1258 = vmax.xlane.f32.xlu0 %v1192
        %v1259 = vpop.xlane.xlu0 %1258
        %1260 = vmax.xlane.f32.xlu0 %v1197
        %v1261 = vpop.xlane.xlu0 %1260
        %1262 = vmax.xlane.f32.xlu0 %v1202
        %v1263 = vpop.xlane.xlu0 %1262
        %1264 = vmax.xlane.f32.xlu0 %v1207
        %v1265 = vpop.xlane.xlu0 %1264
        %1266 = vmax.xlane.f32.xlu0 %v1212
        %v1267 = vpop.xlane.xlu0 %1266
        %1268 = vmax.xlane.f32.xlu0 %v1217
        %v1269 = vpop.xlane.xlu0 %1268
        %1270 = vmax.xlane.f32.xlu0 %v1222
        %v1271 = vpop.xlane.xlu0 %1270
        %1272 = vmax.xlane.f32.xlu0 %v1227
        %v1273 = vpop.xlane.xlu0 %1272
        %1274 = vmax.xlane.f32.xlu0 %v1232
        %v1275 = vpop.xlane.xlu0 %1274
        %1276 = vmax.xlane.f32.xlu0 %v1237
        %v1277 = vpop.xlane.xlu0 %1276
        %1278 = vmax.xlane.f32.xlu0 %v1242
        %v1279 = vpop.xlane.xlu0 %1278
        %1280 = vmax.xlane.f32.xlu0 %v1247
        %v1281 = vpop.xlane.xlu0 %1280
        %v1282 = vsub.f32 %v1172, %v1251
        %v1283 = vsub.f32 %v1177, %v1253
        %v1284 = vsub.f32 %v1182, %v1255
        %v1285 = vsub.f32 %v1187, %v1257
        %v1286 = vsub.f32 %v1192, %v1259
        %v1287 = vsub.f32 %v1197, %v1261
        %v1288 = vsub.f32 %v1202, %v1263
        %v1289 = vsub.f32 %v1207, %v1265
        %v1290 = vsub.f32 %v1212, %v1267
        %v1291 = vsub.f32 %v1217, %v1269
        %v1292 = vsub.f32 %v1222, %v1271
        %v1293 = vsub.f32 %v1227, %v1273
        %v1294 = vsub.f32 %v1232, %v1275
        %v1295 = vsub.f32 %v1237, %v1277
        %v1296 = vsub.f32 %v1242, %v1279
        %v1297 = vsub.f32 %v1247, %v1281
        %v1298 = vmul.f32 %v1282, 1.442695
        %v1299 = vpow.pop %v1298
        %v1300 = vmul.f32 %v1283, 1.442695
        %v1301 = vpow.pop %v1300
        %v1302 = vmul.f32 %v1284, 1.442695
        %v1303 = vpow.pop %v1302
        %v1304 = vmul.f32 %v1285, 1.442695
        %v1305 = vpow.pop %v1304
        %v1306 = vmul.f32 %v1286, 1.442695
        %v1307 = vpow.pop %v1306
        %v1308 = vmul.f32 %v1287, 1.442695
        %v1309 = vpow.pop %v1308
        %v1310 = vmul.f32 %v1288, 1.442695
        %v1311 = vpow.pop %v1310
        %v1312 = vmul.f32 %v1289, 1.442695
        %v1313 = vpow.pop %v1312
        %v1314 = vmul.f32 %v1290, 1.442695
        %v1315 = vpow.pop %v1314
        %v1316 = vmul.f32 %v1291, 1.442695
        %v1317 = vpow.pop %v1316
        %v1318 = vmul.f32 %v1292, 1.442695
        %v1319 = vpow.pop %v1318
        %v1320 = vmul.f32 %v1293, 1.442695
        %v1321 = vpow.pop %v1320
        %v1322 = vmul.f32 %v1294, 1.442695
        %v1323 = vpow.pop %v1322
        %v1324 = vmul.f32 %v1295, 1.442695
        %v1325 = vpow.pop %v1324
        %v1326 = vmul.f32 %v1296, 1.442695
        %v1327 = vpow.pop %v1326
        %v1328 = vmul.f32 %v1297, 1.442695
        %v1329 = vpow.pop %v1328
        %1330 = vadd.xlane.f32.xlu0 %v1299
        %v1331 = vpop.xlane.xlu0 %1330
        %1332 = vadd.xlane.f32.xlu0 %v1301
        %v1333 = vpop.xlane.xlu0 %1332
        %1334 = vadd.xlane.f32.xlu0 %v1303
        %v1335 = vpop.xlane.xlu0 %1334
        %1336 = vadd.xlane.f32.xlu0 %v1305
        %v1337 = vpop.xlane.xlu0 %1336
        %1338 = vadd.xlane.f32.xlu0 %v1307
        %v1339 = vpop.xlane.xlu0 %1338
        %1340 = vadd.xlane.f32.xlu0 %v1309
        %v1341 = vpop.xlane.xlu0 %1340
        %1342 = vadd.xlane.f32.xlu0 %v1311
        %v1343 = vpop.xlane.xlu0 %1342
        %1344 = vadd.xlane.f32.xlu0 %v1313
        %v1345 = vpop.xlane.xlu0 %1344
        %1346 = vadd.xlane.f32.xlu0 %v1315
        %v1347 = vpop.xlane.xlu0 %1346
        %1348 = vadd.xlane.f32.xlu0 %v1317
        %v1349 = vpop.xlane.xlu0 %1348
        %1350 = vadd.xlane.f32.xlu0 %v1319
        %v1351 = vpop.xlane.xlu0 %1350
        %1352 = vadd.xlane.f32.xlu0 %v1321
        %v1353 = vpop.xlane.xlu0 %1352
        %1354 = vadd.xlane.f32.xlu0 %v1323
        %v1355 = vpop.xlane.xlu0 %1354
        %1356 = vadd.xlane.f32.xlu0 %v1325
        %v1357 = vpop.xlane.xlu0 %1356
        %1358 = vadd.xlane.f32.xlu0 %v1327
        %v1359 = vpop.xlane.xlu0 %1358
        %1360 = vadd.xlane.f32.xlu0 %v1329
        %v1361 = vpop.xlane.xlu0 %1360
        %v1362 = vrcp.pop %v1331
        %v1363 = vrcp.pop %v1333
        %v1364 = vrcp.pop %v1335
        %v1365 = vrcp.pop %v1337
        %v1366 = vrcp.pop %v1339
        %v1367 = vrcp.pop %v1341
        %v1368 = vrcp.pop %v1343
        %v1369 = vrcp.pop %v1345
        %v1370 = vrcp.pop %v1347
        %v1371 = vrcp.pop %v1349
        %v1372 = vrcp.pop %v1351
        %v1373 = vrcp.pop %v1353
        %v1374 = vrcp.pop %v1355
        %v1375 = vrcp.pop %v1357
        %v1376 = vrcp.pop %v1359
        %v1377 = vrcp.pop %v1361
        %v1378 = vmul.f32 %v1299, %v1362
        %v1379 = vmul.f32 %v1301, %v1363
        %v1380 = vmul.f32 %v1303, %v1364
        %v1381 = vmul.f32 %v1305, %v1365
        %v1382 = vmul.f32 %v1307, %v1366
        %v1383 = vmul.f32 %v1309, %v1367
        %v1384 = vmul.f32 %v1311, %v1368
        %v1385 = vmul.f32 %v1313, %v1369
        %v1386 = vmul.f32 %v1315, %v1370
        %v1387 = vmul.f32 %v1317, %v1371
        %v1388 = vmul.f32 %v1319, %v1372
        %v1389 = vmul.f32 %v1321, %v1373
        %v1390 = vmul.f32 %v1323, %v1374
        %v1391 = vmul.f32 %v1325, %v1375
        %v1392 = vmul.f32 %v1327, %v1376
        %v1393 = vmul.f32 %v1329, %v1377
        %1394 = vst [vmem:[%s367] sm:$0xff] %v1172
        %1395 = vst [vmem:[%s367 + $0x10] sm:$0xff] %v1177
        %1396 = vst [vmem:[%s367 + $0x20] sm:$0xff] %v1182
        %1397 = vst [vmem:[%s367 + $0x30] sm:$0xff] %v1187
        %1398 = vst [vmem:[%s367 + $0x40] sm:$0xff] %v1192
        %1399 = vst [vmem:[%s367 + $0x50] sm:$0xff] %v1197
        %1400 = vst [vmem:[%s367 + $0x60] sm:$0xff] %v1202
        %1401 = vst [vmem:[%s367 + $0x70] sm:$0xff] %v1207
        %1402 = vst [vmem:[%s367 + $0x80] sm:$0xff] %v1212
        %1403 = vst [vmem:[%s367 + $0x90] sm:$0xff] %v1217
        %1404 = vst [vmem:[%s367 + $0xa0] sm:$0xff] %v1222
        %1405 = vst [vmem:[%s367 + $0xb0] sm:$0xff] %v1227
        %1406 = vst [vmem:[%s367 + $0xc0] sm:$0xff] %v1232
        %1407 = vst [vmem:[%s367 + $0xd0] sm:$0xff] %v1237
        %1408 = vst [vmem:[%s367 + $0xe0] sm:$0xff] %v1242
        %1409 = vst [vmem:[%s367 + $0xf0] sm:$0xff] %v1247
        %1410 = vst [vmem:[%s367 + $0x8] sm:$0xff] %v1378
        %1411 = vst [vmem:[%s367 + $0x18] sm:$0xff] %v1379
        %1412 = vst [vmem:[%s367 + $0x28] sm:$0xff] %v1380
        %1413 = vst [vmem:[%s367 + $0x38] sm:$0xff] %v1381
        %1414 = vst [vmem:[%s367 + $0x48] sm:$0xff] %v1382
        %1415 = vst [vmem:[%s367 + $0x58] sm:$0xff] %v1383
        %1416 = vst [vmem:[%s367 + $0x68] sm:$0xff] %v1384
        %1417 = vst [vmem:[%s367 + $0x78] sm:$0xff] %v1385
        %1418 = vst [vmem:[%s367 + $0x88] sm:$0xff] %v1386
        %1419 = vst [vmem:[%s367 + $0x98] sm:$0xff] %v1387
        %1420 = vst [vmem:[%s367 + $0xa8] sm:$0xff] %v1388
        %1421 = vst [vmem:[%s367 + $0xb8] sm:$0xff] %v1389
        %1422 = vst [vmem:[%s367 + $0xc8] sm:$0xff] %v1390
        %1423 = vst [vmem:[%s367 + $0xd8] sm:$0xff] %v1391
        %1424 = vst [vmem:[%s367 + $0xe8] sm:$0xff] %v1392
        %1425 = vst [vmem:[%s367 + $0xf8] sm:$0xff] %v1393
        %s1426 = sand.u32 %s248, 1
        %s1427 = scalar_lea.sflag [#allocation3], %s1426
        %s1428 = sand.u32 %s248, 1
        %s1429 = smul.addr %s1428, 256
        %s1430 = scalar_lea.vmem [#allocation5], %s1429
        // Predicated region
        $region65: #{tpu_custom_call.1} parent=59 // pred_check
          %p1431 = pneg %p258
        $region66: #{tpu_custom_call.1} parent=59 // pred_check_branch
          %1433 = sbr.rel (%p1431) target = $region68
        $region67: #{tpu_custom_call.1} parent=59 // pred_region
          %s1434 = smul.u32 16, %s25
          %s1436 = ssub.s32 4096, 4096
          %1437 = vsyncadd %s1427, %s1436
          %s1438 = smul.addr %s1434, 2
          %s1439 = smul.addr %s1438, 128
          %s1440 = scalar_lea.hbm %s10, %s1439
          %s1441 = sshll.u32 %s1430, 4
          %s1442 = int_to_ptr.vmem [resolvable:$true] %s1441
          %1447 = dma.vmem_to_hbm [thread:$0]  %s1442, 4096, %s1440, %s1427, 256, 256, 16
        $region68: #{tpu_custom_call.1} parent=59 // pred_fallthru
          _
      $region60: #{tpu_custom_call.1} parent=5 // pred_fallthru
        _
      %p1448 = scmp.le.s32.totalorder 2, %s20
      // Predicated region
      $region69: #{tpu_custom_call.1} parent=5 // pred_check
        %p1449 = pneg %p1448
      $region70: #{tpu_custom_call.1} parent=5 // pred_check_branch
        %1451 = sbr.rel (%p1449) target = $region72
      $region71: #{tpu_custom_call.1} parent=5 // pred_region
        %s1452 = ssub.s32 %s20, 2
        // Predicated region
        $region73: #{tpu_custom_call.1} parent=71 // pred_check
          %p1453 = pneg %p264
        $region74: #{tpu_custom_call.1} parent=71 // pred_check_branch
          %1455 = sbr.rel (%p1453) target = $region76
        $region75: #{tpu_custom_call.1} parent=71 // pred_region
          %s1456 = sand.u32 %s249, 1
          %s1457 = scalar_lea.sflag [#allocation3], %s1456
          %s1458 = sand.u32 %s249, 1
          %s1459 = smul.addr %s1458, 256
          %s1460 = scalar_lea.vmem [#allocation5], %s1459
          %1461 = dma.done %s1457, 4096
        $region76: #{tpu_custom_call.1} parent=71 // pred_fallthru
          _
      $region72: #{tpu_custom_call.1} parent=5 // pred_fallthru
        _
    $region6: #{tpu_custom_call.1} parent=1 // loop_footer
      %s24 = sadd.s32 1, %s20
    $region7: #{tpu_custom_call.1} parent=1 // loop_footer_branch
      %19 = sbr.rel target = $region3
    $region8: #{tpu_custom_call.1} parent=1 // loop_exit
      _
    %1462 = vsyncpa [#allocation3], 1
    %s1463 = scalar_lea.sflag [#allocation3], 1
    %1464 = vsyncpa %s1463, 1
    %1465 = vsyncpa [#allocation4], 1
    %s1466 = scalar_lea.sflag [#allocation4], 1
    %1467 = vsyncpa %s1466, 1

</llo_original>
